<compile_context>
chip_gen: v6e
topology: v6e:2x2x1
jax: 0.10.0
libtpu: 0.0.40
codegen_flags: <defaults>
</compile_context>

<pallas_src>
import functools
import math

import jax
import jax.numpy as jnp
from jax.experimental import pallas as pl
from jax.experimental.pallas import tpu as pltpu

_VMEM_LIMIT = 32 * 1024 * 1024  # safe on v5e/v6e (128 MiB) and v7x (64 MiB physical)


def _pick_tile(dim, candidates):
    """Largest MXU-friendly tile that divides `dim`; otherwise the full dim."""
    for c in candidates:
        if dim >= c and dim % c == 0:
            return c
    return dim


# ----------------------------- tiled linear (QKV) -----------------------------

def _linear_kernel(x_ref, w_ref, b_ref, o_ref, acc_ref):
    @pl.when(pl.program_id(2) == 0)
    def _():
        acc_ref[...] = jnp.zeros_like(acc_ref)

    acc_ref[...] += jnp.dot(
        x_ref[...].astype(jnp.bfloat16), w_ref[...],
        preferred_element_type=jnp.float32)

    @pl.when(pl.program_id(2) == pl.num_programs(2) - 1)
    def _():
        o_ref[...] = (acc_ref[...] + b_ref[...]).astype(o_ref.dtype)


def linear_bf16(x2d, w_bf16, b, out_dtype=jnp.float32):
    # x2d: [M, K] f32, w_bf16: [K, N] bf16, b: [N] f32
    M, K = x2d.shape
    K2, N = w_bf16.shape
    assert K == K2
    tm = _pick_tile(M, (256, 128))      # 256-multiples feed v6e/v7x MXU; 128 ok on v5e
    tn = _pick_tile(N, (256, 128))
    tk = _pick_tile(K, (512, 256, 128))
    grid = (M // tm, N // tn, K // tk)
    b2d = b.reshape(1, N).astype(jnp.float32)
    return pl.pallas_call(
        _linear_kernel,
        out_shape=jax.ShapeDtypeStruct((M, N), out_dtype),
        grid=grid,
        in_specs=[
            pl.BlockSpec((tm, tk), lambda i, j, k: (i, k)),
            pl.BlockSpec((tk, tn), lambda i, j, k: (k, j)),
            pl.BlockSpec((1, tn), lambda i, j, k: (0, j)),
        ],
        out_specs=pl.BlockSpec((tm, tn), lambda i, j, k: (i, j)),
        scratch_shapes=[pltpu.VMEM((tm, tn), jnp.float32)],
        compiler_params=pltpu.CompilerParams(
            dimension_semantics=("parallel", "parallel", "arbitrary"),
            vmem_limit_bytes=_VMEM_LIMIT),
    )(x2d, w_bf16, b2d)


# -------------------- local attention + LayerNorm + residual ------------------

def _local_attn_ln_kernel(q_ref, k_ref, v_ref, x_ref, g_ref, b_ref, o_ref,
                          *, scale, padding, eps):
    # q/k/v: [1, H, S, D] bf16 ; x (residual): [1, S, E] f32 ; g,b: [1, E] f32
    q = q_ref[0]
    q = q * jnp.asarray(scale, q.dtype)          # scale q (S*D muls, not S*Spad)
    k = k_ref[0]
    v = v_ref[0]
    H, S, D = q.shape
    p = padding
    Spad = S + 2 * p

    # Zero-pad keys inside VMEM (no HBM-level jnp.pad / extra tensor).  The zero
    # rows reproduce the reference's F.pad-then-unfold scores (raw score 0 for
    # padded keys, still included in the softmax denominator).
    zpad = jnp.zeros((H, p, D), k.dtype)
    kpad = jnp.concatenate([zpad, k, zpad], axis=1)          # [H, Spad, D]

    # scores[h, s, c] = scale * <q[h,s], k_padded[h,c]> ; one MXU dot batched over H.
    # TODO(synk): for long sequences, tile queries and DMA only the [Tq+2p, D]
    # key window instead of the full [S, Spad] score tile.
    scores = jax.lax.dot_general(
        q, kpad, (((2,), (2,)), ((0,), (0,))),
        preferred_element_type=jnp.float32)                  # [H, S, Spad] f32

    # Window band computed once in 2D and broadcast over heads (VPU-cheap).
    rows = jax.lax.broadcasted_iota(jnp.int32, (S, Spad), 0)
    cols = jax.lax.broadcasted_iota(jnp.int32, (S, Spad), 1)
    band = (cols >= rows) & (cols <= rows + 2 * p)           # window c - s in [0, 2p]

    neg = jnp.float32(-1e30)
    s_masked = jnp.where(band[None, :, :], scores, neg)
    m = jnp.max(s_masked, axis=-1, keepdims=True)
    e = jnp.exp(s_masked - m)
    denom = jnp.sum(e, axis=-1, keepdims=True)
    w = e * pl.reciprocal(denom, approx=True)                # softmax over the window

    # Reproduces the reference's scatter qk[:, :, i, j] = attn followed by the
    # [:, :, :, p:-p] slice (including its negative-index wrap + off-by-p behavior):
    # the banded softmax matrix shifted left by 2p columns.
    qk = w[:, :, 2 * p:2 * p + S]                            # [H, S, S]

    # output.transpose(1, 2).view(B, S, E): heads packed along the lane axis.
    outs = []
    for h in range(H):                                       # static unroll over heads
        outs.append(jnp.dot(qk[h].astype(v.dtype), v[h],
                            preferred_element_type=jnp.float32))   # [S, D]
    y = jnp.concatenate(outs, axis=-1)                       # [S, E] f32, lane-dense

    # Fused epilogue: LayerNorm(attn_out) * g + b + x   (== normalization(a) + x)
    mean = jnp.mean(y, axis=-1, keepdims=True)
    var = jnp.mean((y - mean) ** 2, axis=-1, keepdims=True)
    normed = (y - mean) * jax.lax.rsqrt(var + eps)
    o_ref[0] = normed * g_ref[...] + b_ref[...] + x_ref[0]


def local_attention_ln(qh, kh, vh, x, ln_g, ln_b, *, scale, padding, eps=1e-5):
    # qh/kh/vh: [B, H, S, D] bf16 (reference's raw .view layout), x: [B, S, E] f32
    B, H, S, D = qh.shape
    E = H * D
    return pl.pallas_call(
        functools.partial(_local_attn_ln_kernel, scale=scale, padding=padding, eps=eps),
        out_shape=jax.ShapeDtypeStruct((B, S, E), jnp.float32),
        grid=(B,),
        in_specs=[
            pl.BlockSpec((1, H, S, D), lambda b: (b, 0, 0, 0)),
            pl.BlockSpec((1, H, S, D), lambda b: (b, 0, 0, 0)),
            pl.BlockSpec((1, H, S, D), lambda b: (b, 0, 0, 0)),
            pl.BlockSpec((1, S, E), lambda b: (b, 0, 0)),
            pl.BlockSpec((1, E), lambda b: (0, 0)),
            pl.BlockSpec((1, E), lambda b: (0, 0)),
        ],
        out_specs=pl.BlockSpec((1, S, E), lambda b: (b, 0, 0)),
        compiler_params=pltpu.CompilerParams(
            dimension_semantics=("parallel",),
            vmem_limit_bytes=_VMEM_LIMIT),
    )(qh, kh, vh, x, ln_g.reshape(1, E), ln_b.reshape(1, E))


# ----------------- fused fc1 -> ReLU -> fc2 -> LayerNorm -> +res ---------------

def _fc_block_ln_kernel(x_ref, w1_ref, b1_ref, w2_ref, b2_ref, g_ref, bln_ref,
                        o_ref, *, eps):
    x = x_ref[...]                                            # [tm, E] f32
    # TODO(synk): Dropout(0.2) treated as identity (inference / eval mode).
    h = jnp.dot(x.astype(jnp.bfloat16), w1_ref[...],
                preferred_element_type=jnp.float32) + b1_ref[...]
    h = jnp.maximum(h, 0.0)
    fc = jnp.dot(h.astype(jnp.bfloat16), w2_ref[...],
                 preferred_element_type=jnp.float32) + b2_ref[...]
    mean = jnp.mean(fc, axis=-1, keepdims=True)
    var = jnp.mean((fc - mean) ** 2, axis=-1, keepdims=True)
    normed = (fc - mean) * jax.lax.rsqrt(var + eps)
    o_ref[...] = normed * g_ref[...] + bln_ref[...] + x


def fc_block_ln(x2d, w1, b1, w2, b2, ln_g, ln_b, *, eps=1e-5):
    # x2d: [M, E] f32 ; w1: [E, H] bf16 ; w2: [H, E] bf16
    M, E = x2d.shape
    _, Hdn = w1.shape
    tm = _pick_tile(M, (256, 128))
    return pl.pallas_call(
        functools.partial(_fc_block_ln_kernel, eps=eps),
        out_shape=jax.ShapeDtypeStruct((M, E), jnp.float32),
        grid=(M // tm,),
        in_specs=[
            pl.BlockSpec((tm, E), lambda i: (i, 0)),
            pl.BlockSpec((E, Hdn), lambda i: (0, 0)),
            pl.BlockSpec((1, Hdn), lambda i: (0, 0)),
            pl.BlockSpec((Hdn, E), lambda i: (0, 0)),
            pl.BlockSpec((1, E), lambda i: (0, 0)),
            pl.BlockSpec((1, E), lambda i: (0, 0)),
            pl.BlockSpec((1, E), lambda i: (0, 0)),
        ],
        out_specs=pl.BlockSpec((tm, E), lambda i: (i, 0)),
        compiler_params=pltpu.CompilerParams(
            dimension_semantics=("parallel",),
            vmem_limit_bytes=_VMEM_LIMIT),
    )(x2d, w1, b1.reshape(1, Hdn), w2, b2.reshape(1, E),
      ln_g.reshape(1, E), ln_b.reshape(1, E))


# ------------------------------ JAX glue / model ------------------------------

def sinusoidal_pe(S, E):
    # TODO(synk): PositionalEncoding class not provided in the reference; standard
    # sinusoidal encoding (x + pe) is used.
    pos = jnp.arange(S, dtype=jnp.float32)[:, None]
    div = jnp.exp(jnp.arange(0, E, 2, dtype=jnp.float32) * (-math.log(10000.0) / E))
    pe = jnp.zeros((S, E), jnp.float32)
    pe = pe.at[:, 0::2].set(jnp.sin(pos * div))
    pe = pe.at[:, 1::2].set(jnp.cos(pos * div))
    return pe


def init_params(key, vocab_size, S, E, hidden, num_classes):
    keys = jax.random.split(key, 8)

    def lin(k, fin, fout):
        kw, kb = jax.random.split(k)
        bound = 1.0 / math.sqrt(fin)
        w = jax.random.uniform(kw, (fin, fout), jnp.float32, -bound, bound)
        b = jax.random.uniform(kb, (fout,), jnp.float32, -bound, bound)
        return w, b

    emb = jax.random.normal(keys[0], (vocab_size, E), jnp.float32)
    emb = emb.at[vocab_size - 1].set(0.0)  # padding_idx = len(vocab) - 1

    wq, bq = lin(keys[1], E, E)
    wk, bk = lin(keys[2], E, E)
    wv, bv = lin(keys[3], E, E)
    w_fc1, b_fc1 = lin(keys[4], E, hidden)
    w_fc2, b_fc2 = lin(keys[5], hidden, E)
    w_out, b_out = lin(keys[6], E * S, num_classes)

    return dict(
        emb=emb, pe=sinusoidal_pe(S, E),
        # fused QKV weights stored pre-transposed [E, 3E]; matmul operands in bf16
        wqkv=jnp.concatenate([wq, wk, wv], axis=1).astype(jnp.bfloat16),
        bqkv=jnp.concatenate([bq, bk, bv], axis=0),
        w_fc1=w_fc1.astype(jnp.bfloat16), b_fc1=b_fc1,
        w_fc2=w_fc2.astype(jnp.bfloat16), b_fc2=b_fc2,
        w_out=w_out, b_out=b_out,
        ln_g=jnp.ones((E,), jnp.float32), ln_b=jnp.zeros((E,), jnp.float32),
    )


def local_model_forward(params, tokens, *, encoders, num_heads, window_size):
    B, S = tokens.shape
    E = params["emb"].shape[1]
    D = E // num_heads
    p = (window_size - 1) // 2
    scale = D ** (-0.5)

    x = jnp.take(params["emb"], tokens, axis=0)          # [B, S, E]
    x = x + params["pe"][None, :, :]

    for _ in range(encoders):
        # Same attention / fc / layernorm parameters reused every iteration,
        # exactly like the reference (shared modules).
        x2d = x.reshape(B * S, E)

        # Fused q/k/v projection: one tiled kernel, one read of x, [M, 3E] output.
        qkv = linear_bf16(x2d, params["wqkv"], params["bqkv"],
                          out_dtype=jnp.bfloat16)         # [B*S, 3E]
        q, k, v = jnp.split(qkv, 3, axis=-1)
        # Reference does a raw .view(B, H, S, D) (row-major, NO transpose) -> keep it.
        qh = q.reshape(B, num_heads, S, D)
        kh = k.reshape(B, num_heads, S, D)
        vh = v.reshape(B, num_heads, S, D)

        # attention + LayerNorm + residual in one kernel (lane-dense [S, E] output).
        x = local_attention_ln(qh, kh, vh, x, params["ln_g"], params["ln_b"],
                               scale=scale, padding=p)

        # fc1 -> ReLU -> fc2 -> LayerNorm -> +residual in one kernel.
        x = fc_block_ln(x.reshape(B * S, E),
                        params["w_fc1"], params["b_fc1"],
                        params["w_fc2"], params["b_fc2"],
                        params["ln_g"], params["ln_b"]).reshape(B, S, E)

    flat = x.reshape(B, S * E)
    # Tiny [B, S*E] @ [S*E, C] classifier left to XLA (B rows underfill sublanes,
    # C < 128 would force masked lane stores in Pallas).
    logits = jnp.dot(flat, params["w_out"]) + params["b_out"]
    return logits


if __name__ == "__main__":
    B, S, E = 2, 16, 32
    num_heads, window_size = 4, 5
    hidden, num_classes, encoders = 32, 6, 2
    vocab_size = 32

    key = jax.random.PRNGKey(0)
    pkey, dkey = jax.random.split(key)
    params = init_params(pkey, vocab_size, S, E, hidden, num_classes)
    tokens = jax.random.randint(dkey, (B, S), 0, vocab_size - 1, dtype=jnp.int32)

    fwd = jax.jit(functools.partial(
        local_model_forward, encoders=encoders,
        num_heads=num_heads, window_size=window_size))
    logits = fwd(params, tokens)
    jax.block_until_ready(logits)
    assert logits.shape == (B, num_classes)
    assert bool(jnp.all(jnp.isfinite(logits)))
    print("KERNEL_OK")
</pallas_src>

<mosaic_0001>
module attributes {stable_mosaic.version = 11 : i64} {
  func.func @_linear_kernel(%arg0: i32, %arg1: i32, %arg2: i32, %arg3: memref<32x32xf32, #tpu.memory_space<vmem>>, %arg4: memref<32x96xbf16, #tpu.memory_space<vmem>>, %arg5: memref<1x96xf32, #tpu.memory_space<vmem>>, %arg6: memref<32x96xbf16, #tpu.memory_space<vmem>>, %arg7: memref<32x96xf32, #tpu.memory_space<vmem>>) attributes {dimension_semantics = [#tpu.dimension_semantics<parallel>, #tpu.dimension_semantics<parallel>, #tpu.dimension_semantics<arbitrary>], iteration_bounds = array<i64: 1, 1, 1>, scalar_prefetch = 0 : i64, scratch_operands = 1 : i64, tpu.core_type = #tpu.core_type<tc>, window_params = [{transform_indices = @transform_0, window_bounds = array<i64: 32, 32>}, {transform_indices = @transform_1, window_bounds = array<i64: 32, 96>}, {transform_indices = @transform_2, window_bounds = array<i64: 1, 96>}, {transform_indices = @transform_3, window_bounds = array<i64: 32, 96>}]} {
    %c0_i32 = arith.constant 0 : i32
    %0 = arith.cmpi eq, %arg2, %c0_i32 : i32
    %1 = arith.extui %0 : i1 to i32
    %c0_i32_0 = arith.constant 0 : i32
    %2 = arith.cmpi ne, %1, %c0_i32_0 : i32
    scf.if %2 {
      %cst_10 = arith.constant 0.000000e+00 : f32
      %13 = vector.broadcast %cst_10 : f32 to vector<32x96xf32>
      %c0_11 = arith.constant 0 : index
      %c0_12 = arith.constant 0 : index
      %14 = vector.load %arg7[%c0_11, %c0_12] : memref<32x96xf32, #tpu.memory_space<vmem>>, vector<32x96xf32>
      tpu.vector_store %arg7[%c0_11, %c0_12], %13 {strides = array<i32>} : memref<32x96xf32, #tpu.memory_space<vmem>>, vector<32x96xf32>,
    } else {
    }
    %c0 = arith.constant 0 : index
    %c0_1 = arith.constant 0 : index
    %3 = vector.load %arg7[%c0, %c0_1] : memref<32x96xf32, #tpu.memory_space<vmem>>, vector<32x96xf32>
    %c0_2 = arith.constant 0 : index
    %c0_3 = arith.constant 0 : index
    %4 = vector.load %arg3[%c0_2, %c0_3] : memref<32x32xf32, #tpu.memory_space<vmem>>, vector<32x32xf32>
    %5 = arith.truncf %4 : vector<32x32xf32> to vector<32x32xbf16>
    %c0_4 = arith.constant 0 : index
    %c0_5 = arith.constant 0 : index
    %6 = vector.load %arg4[%c0_4, %c0_5] : memref<32x96xbf16, #tpu.memory_space<vmem>>, vector<32x96xbf16>
    %cst = arith.constant dense<0.000000e+00> : vector<32x96xf32>
    %7 = tpu.matmul %5, %6, %cst {dimension_numbers = #tpu.dot_dimension_numbers<[1], [0], [0], [1], [0, 0, 1, 1], [], []>} : vector<32x32xbf16>, vector<32x96xbf16>, vector<32x96xf32> -> vector<32x96xf32>
    %8 = arith.addf %3, %7 : vector<32x96xf32>
    %c0_6 = arith.constant 0 : index
    %c0_7 = arith.constant 0 : index
    %9 = vector.load %arg7[%c0_6, %c0_7] : memref<32x96xf32, #tpu.memory_space<vmem>>, vector<32x96xf32>
    tpu.vector_store %arg7[%c0_6, %c0_7], %8 {strides = array<i32>} : memref<32x96xf32, #tpu.memory_space<vmem>>, vector<32x96xf32>,
    %c0_i32_8 = arith.constant 0 : i32
    %10 = arith.cmpi eq, %arg2, %c0_i32_8 : i32
    %11 = arith.extui %10 : i1 to i32
    %c0_i32_9 = arith.constant 0 : i32
    %12 = arith.cmpi ne, %11, %c0_i32_9 : i32
    scf.if %12 {
      %c0_10 = arith.constant 0 : index
      %c0_11 = arith.constant 0 : index
      %13 = vector.load %arg7[%c0_10, %c0_11] : memref<32x96xf32, #tpu.memory_space<vmem>>, vector<32x96xf32>
      %c0_12 = arith.constant 0 : index
      %c0_13 = arith.constant 0 : index
      %14 = vector.load %arg5[%c0_12, %c0_13] : memref<1x96xf32, #tpu.memory_space<vmem>>, vector<1x96xf32>
      %15 = vector.broadcast %14 : vector<1x96xf32> to vector<32x96xf32>
      %16 = arith.addf %13, %15 : vector<32x96xf32>
      %17 = arith.truncf %16 : vector<32x96xf32> to vector<32x96xbf16>
      %c0_14 = arith.constant 0 : index
      %c0_15 = arith.constant 0 : index
      %18 = vector.load %arg6[%c0_14, %c0_15] : memref<32x96xbf16, #tpu.memory_space<vmem>>, vector<32x96xbf16>
      tpu.vector_store %arg6[%c0_14, %c0_15], %17 {strides = array<i32>} : memref<32x96xbf16, #tpu.memory_space<vmem>>, vector<32x96xbf16>,
    } else {
    }
    return
  }
  func.func @transform_0(%arg0: i32, %arg1: i32, %arg2: i32) -> (i32, i32) {
    %c0_i32 = arith.constant 0 : i32
    return %arg0, %arg2 : i32, i32
  }
  func.func @transform_1(%arg0: i32, %arg1: i32, %arg2: i32) -> (i32, i32) {
    %c0_i32 = arith.constant 0 : i32
    return %arg2, %arg1 : i32, i32
  }
  func.func @transform_2(%arg0: i32, %arg1: i32, %arg2: i32) -> (i32, i32) {
    %c0_i32 = arith.constant 0 : i32
    %c0_i32_0 = arith.constant 0 : i32
    return %c0_i32, %arg1 : i32, i32
  }
  func.func @transform_3(%arg0: i32, %arg1: i32, %arg2: i32) -> (i32, i32) {
    %c0_i32 = arith.constant 0 : i32
    return %arg0, %arg1 : i32, i32
  }
}

module attributes {stable_mosaic.version = 11 : i64} {
  func.func @_local_attn_ln_kernel(%arg0: i32, %arg1: memref<1x4x16x8xbf16, #tpu.memory_space<vmem>>, %arg2: memref<1x4x16x8xbf16, #tpu.memory_space<vmem>>, %arg3: memref<1x4x16x8xbf16, #tpu.memory_space<vmem>>, %arg4: memref<1x16x32xf32, #tpu.memory_space<vmem>>, %arg5: memref<1x32xf32, #tpu.memory_space<vmem>>, %arg6: memref<1x32xf32, #tpu.memory_space<vmem>>, %arg7: memref<1x16x32xf32, #tpu.memory_space<vmem>>) attributes {dimension_semantics = [#tpu.dimension_semantics<parallel>], iteration_bounds = array<i64: 2>, scalar_prefetch = 0 : i64, scratch_operands = 0 : i64, tpu.core_type = #tpu.core_type<tc>, window_params = [{transform_indices = @transform_0, window_bounds = array<i64: 1, 4, 16, 8>}, {transform_indices = @transform_1, window_bounds = array<i64: 1, 4, 16, 8>}, {transform_indices = @transform_2, window_bounds = array<i64: 1, 4, 16, 8>}, {transform_indices = @transform_3, window_bounds = array<i64: 1, 16, 32>}, {pipeline_mode = #tpu.pipeline_mode<synchronous>, transform_indices = @transform_4, window_bounds = array<i64: 1, 32>}, {pipeline_mode = #tpu.pipeline_mode<synchronous>, transform_indices = @transform_5, window_bounds = array<i64: 1, 32>}, {transform_indices = @transform_6, window_bounds = array<i64: 1, 16, 32>}]} {
    %c0 = arith.constant 0 : index
    %c0_0 = arith.constant 0 : index
    %c0_1 = arith.constant 0 : index
    %c0_2 = arith.constant 0 : index
    %0 = vector.load %arg1[%c0, %c0_0, %c0_1, %c0_2] : memref<1x4x16x8xbf16, #tpu.memory_space<vmem>>, vector<1x4x16x8xbf16>
    %1 = vector.shape_cast %0 : vector<1x4x16x8xbf16> to vector<4x16x8xbf16>
    %cst = arith.constant 3.535160e-01 : bf16
    %2 = vector.broadcast %cst : bf16 to vector<4x16x8xbf16>
    %3 = arith.mulf %1, %2 : vector<4x16x8xbf16>
    %c0_3 = arith.constant 0 : index
    %c0_4 = arith.constant 0 : index
    %c0_5 = arith.constant 0 : index
    %c0_6 = arith.constant 0 : index
    %4 = vector.load %arg2[%c0_3, %c0_4, %c0_5, %c0_6] : memref<1x4x16x8xbf16, #tpu.memory_space<vmem>>, vector<1x4x16x8xbf16>
    %5 = vector.shape_cast %4 : vector<1x4x16x8xbf16> to vector<4x16x8xbf16>
    %c0_7 = arith.constant 0 : index
    %c0_8 = arith.constant 0 : index
    %c0_9 = arith.constant 0 : index
    %c0_10 = arith.constant 0 : index
    %6 = vector.load %arg3[%c0_7, %c0_8, %c0_9, %c0_10] : memref<1x4x16x8xbf16, #tpu.memory_space<vmem>>, vector<1x4x16x8xbf16>
    %7 = vector.shape_cast %6 : vector<1x4x16x8xbf16> to vector<4x16x8xbf16>
    %cst_11 = arith.constant 0.000000e+00 : bf16
    %8 = vector.broadcast %cst_11 : bf16 to vector<4x2x8xbf16>
    %9 = tpu.concatenate %8, %5, %8 in 1 : vector<4x2x8xbf16>, vector<4x16x8xbf16>, vector<4x2x8xbf16> -> vector<4x20x8xbf16>
    %cst_12 = arith.constant dense<0.000000e+00> : vector<4x16x20xf32>
    %10 = tpu.matmul %3, %9, %cst_12 {dimension_numbers = #tpu.dot_dimension_numbers<[2], [2], [1], [1], [0, 0, 0, 1, 1, 1], [0], [0]>} : vector<4x16x8xbf16>, vector<4x20x8xbf16>, vector<4x16x20xf32> -> vector<4x16x20xf32>
    %11 = tpu.iota {dimensions = array<i32: 0>} : vector<16x20xi32>
    %12 = tpu.iota {dimensions = array<i32: 1>} : vector<16x20xi32>
    %13 = arith.cmpi sge, %12, %11 : vector<16x20xi32>
    %c4_i32 = arith.constant 4 : i32
    %14 = vector.broadcast %c4_i32 : i32 to vector<16x20xi32>
    %15 = arith.addi %11, %14 : vector<16x20xi32>
    %16 = arith.cmpi sle, %12, %15 : vector<16x20xi32>
    %17 = arith.andi %13, %16 : vector<16x20xi1>
    %18 = vector.shape_cast %17 : vector<16x20xi1> to vector<1x16x20xi1>
    %cst_13 = arith.constant -1.000000e+30 : f32
    %19 = vector.shape_cast %18 : vector<1x16x20xi1> to vector<1x16x20xi1>
    %20 = vector.broadcast %19 : vector<1x16x20xi1> to vector<4x16x20xi1>
    %21 = vector.broadcast %cst_13 : f32 to vector<4x16x20xf32>
    %22 = arith.select %20, %10, %21 : vector<4x16x20xi1>, vector<4x16x20xf32>
    %cst_14 = arith.constant dense<0xFF800000> : vector<4x16xf32>
    %23 = vector.multi_reduction <maximumf>, %22, %cst_14 [2] : vector<4x16x20xf32> to vector<4x16xf32>
    %24 = vector.shape_cast %23 : vector<4x16xf32> to vector<4x16x1xf32>
    %25 = vector.broadcast %24 : vector<4x16x1xf32> to vector<4x16x20xf32>
    %26 = arith.subf %22, %25 : vector<4x16x20xf32>
    %27 = math.exp %26 : vector<4x16x20xf32>
    %cst_15 = arith.constant dense<0.000000e+00> : vector<4x16xf32>
    %28 = vector.multi_reduction <add>, %27, %cst_15 [2] : vector<4x16x20xf32> to vector<4x16xf32>
    %29 = vector.shape_cast %28 : vector<4x16xf32> to vector<4x16x1xf32>
    %30 = tpu.reciprocal %29 {approx = true} : vector<4x16x1xf32> -> vector<4x16x1xf32>
    %31 = vector.broadcast %30 : vector<4x16x1xf32> to vector<4x16x20xf32>
    %32 = arith.mulf %27, %31 : vector<4x16x20xf32>
    %33 = vector.extract_strided_slice %32 {offsets = [0, 0, 4], sizes = [4, 16, 16], strides = [1, 1, 1]} : vector<4x16x20xf32> to vector<4x16x16xf32>
    %34 = vector.extract_strided_slice %33 {offsets = [0, 0, 0], sizes = [1, 16, 16], strides = [1, 1, 1]} : vector<4x16x16xf32> to vector<1x16x16xf32>
    %35 = vector.shape_cast %34 : vector<1x16x16xf32> to vector<16x16xf32>
    %36 = arith.truncf %35 : vector<16x16xf32> to vector<16x16xbf16>
    %37 = vector.extract_strided_slice %7 {offsets = [0, 0, 0], sizes = [1, 16, 8], strides = [1, 1, 1]} : vector<4x16x8xbf16> to vector<1x16x8xbf16>
    %38 = vector.shape_cast %37 : vector<1x16x8xbf16> to vector<16x8xbf16>
    %cst_16 = arith.constant dense<0.000000e+00> : vector<16x8xf32>
    %39 = tpu.matmul %36, %38, %cst_16 {dimension_numbers = #tpu.dot_dimension_numbers<[1], [0], [0], [1], [0, 0, 1, 1], [], []>} : vector<16x16xbf16>, vector<16x8xbf16>, vector<16x8xf32> -> vector<16x8xf32>
    %40 = vector.extract_strided_slice %33 {offsets = [1, 0, 0], sizes = [1, 16, 16], strides = [1, 1, 1]} : vector<4x16x16xf32> to vector<1x16x16xf32>
    %41 = vector.shape_cast %40 : vector<1x16x16xf32> to vector<16x16xf32>
    %42 = arith.truncf %41 : vector<16x16xf32> to vector<16x16xbf16>
    %43 = vector.extract_strided_slice %7 {offsets = [1, 0, 0], sizes = [1, 16, 8], strides = [1, 1, 1]} : vector<4x16x8xbf16> to vector<1x16x8xbf16>
    %44 = vector.shape_cast %43 : vector<1x16x8xbf16> to vector<16x8xbf16>
    %cst_17 = arith.constant dense<0.000000e+00> : vector<16x8xf32>
    %45 = tpu.matmul %42, %44, %cst_17 {dimension_numbers = #tpu.dot_dimension_numbers<[1], [0], [0], [1], [0, 0, 1, 1], [], []>} : vector<16x16xbf16>, vector<16x8xbf16>, vector<16x8xf32> -> vector<16x8xf32>
    %46 = vector.extract_strided_slice %33 {offsets = [2, 0, 0], sizes = [1, 16, 16], strides = [1, 1, 1]} : vector<4x16x16xf32> to vector<1x16x16xf32>
    %47 = vector.shape_cast %46 : vector<1x16x16xf32> to vector<16x16xf32>
    %48 = arith.truncf %47 : vector<16x16xf32> to vector<16x16xbf16>
    %49 = vector.extract_strided_slice %7 {offsets = [2, 0, 0], sizes = [1, 16, 8], strides = [1, 1, 1]} : vector<4x16x8xbf16> to vector<1x16x8xbf16>
    %50 = vector.shape_cast %49 : vector<1x16x8xbf16> to vector<16x8xbf16>
    %cst_18 = arith.constant dense<0.000000e+00> : vector<16x8xf32>
    %51 = tpu.matmul %48, %50, %cst_18 {dimension_numbers = #tpu.dot_dimension_numbers<[1], [0], [0], [1], [0, 0, 1, 1], [], []>} : vector<16x16xbf16>, vector<16x8xbf16>, vector<16x8xf32> -> vector<16x8xf32>
    %52 = vector.extract_strided_slice %33 {offsets = [3, 0, 0], sizes = [1, 16, 16], strides = [1, 1, 1]} : vector<4x16x16xf32> to vector<1x16x16xf32>
    %53 = vector.shape_cast %52 : vector<1x16x16xf32> to vector<16x16xf32>
    %54 = arith.truncf %53 : vector<16x16xf32> to vector<16x16xbf16>
    %55 = vector.extract_strided_slice %7 {offsets = [3, 0, 0], sizes = [1, 16, 8], strides = [1, 1, 1]} : vector<4x16x8xbf16> to vector<1x16x8xbf16>
    %56 = vector.shape_cast %55 : vector<1x16x8xbf16> to vector<16x8xbf16>
    %cst_19 = arith.constant dense<0.000000e+00> : vector<16x8xf32>
    %57 = tpu.matmul %54, %56, %cst_19 {dimension_numbers = #tpu.dot_dimension_numbers<[1], [0], [0], [1], [0, 0, 1, 1], [], []>} : vector<16x16xbf16>, vector<16x8xbf16>, vector<16x8xf32> -> vector<16x8xf32>
    %58 = tpu.concatenate %39, %45, %51, %57 in 1 : vector<16x8xf32>, vector<16x8xf32>, vector<16x8xf32>, vector<16x8xf32> -> vector<16x32xf32>
    %cst_20 = arith.constant dense<0.000000e+00> : vector<16xf32>
    %59 = vector.multi_reduction <add>, %58, %cst_20 [1] : vector<16x32xf32> to vector<16xf32>
    %60 = vector.shape_cast %59 : vector<16xf32> to vector<16x1xf32>
    %cst_21 = arith.constant 3.200000e+01 : f32
    %61 = vector.broadcast %cst_21 : f32 to vector<16x1xf32>
    %62 = arith.divf %60, %61 : vector<16x1xf32>
    %63 = vector.broadcast %62 : vector<16x1xf32> to vector<16x32xf32>
    %64 = arith.subf %58, %63 : vector<16x32xf32>
    %65 = arith.mulf %64, %64 : vector<16x32xf32>
    %cst_22 = arith.constant dense<0.000000e+00> : vector<16xf32>
    %66 = vector.multi_reduction <add>, %65, %cst_22 [1] : vector<16x32xf32> to vector<16xf32>
    %67 = vector.shape_cast %66 : vector<16xf32> to vector<16x1xf32>
    %cst_23 = arith.constant 3.200000e+01 : f32
    %68 = vector.broadcast %cst_23 : f32 to vector<16x1xf32>
    %69 = arith.divf %67, %68 : vector<16x1xf32>
    %70 = vector.broadcast %62 : vector<16x1xf32> to vector<16x32xf32>
    %71 = arith.subf %58, %70 : vector<16x32xf32>
    %cst_24 = arith.constant 9.99999974E-6 : f32
    %72 = vector.broadcast %cst_24 : f32 to vector<16x1xf32>
    %73 = arith.addf %69, %72 : vector<16x1xf32>
    %74 = math.rsqrt %73 : vector<16x1xf32>
    %75 = vector.broadcast %74 : vector<16x1xf32> to vector<16x32xf32>
    %76 = arith.mulf %71, %75 : vector<16x32xf32>
    %c0_25 = arith.constant 0 : index
    %c0_26 = arith.constant 0 : index
    %77 = vector.load %arg5[%c0_25, %c0_26] : memref<1x32xf32, #tpu.memory_space<vmem>>, vector<1x32xf32>
    %78 = vector.broadcast %77 : vector<1x32xf32> to vector<16x32xf32>
    %79 = arith.mulf %76, %78 : vector<16x32xf32>
    %c0_27 = arith.constant 0 : index
    %c0_28 = arith.constant 0 : index
    %80 = vector.load %arg6[%c0_27, %c0_28] : memref<1x32xf32, #tpu.memory_space<vmem>>, vector<1x32xf32>
    %81 = vector.broadcast %80 : vector<1x32xf32> to vector<16x32xf32>
    %82 = arith.addf %79, %81 : vector<16x32xf32>
    %c0_29 = arith.constant 0 : index
    %c0_30 = arith.constant 0 : index
    %c0_31 = arith.constant 0 : index
    %83 = vector.load %arg4[%c0_29, %c0_30, %c0_31] : memref<1x16x32xf32, #tpu.memory_space<vmem>>, vector<1x16x32xf32>
    %84 = vector.shape_cast %83 : vector<1x16x32xf32> to vector<16x32xf32>
    %85 = arith.addf %82, %84 : vector<16x32xf32>
    %c0_32 = arith.constant 0 : index
    %c0_33 = arith.constant 0 : index
    %c0_34 = arith.constant 0 : index
    %86 = vector.load %arg7[%c0_32, %c0_33, %c0_34] : memref<1x16x32xf32, #tpu.memory_space<vmem>>, vector<1x16x32xf32>
    %87 = vector.shape_cast %86 : vector<1x16x32xf32> to vector<16x32xf32>
    %88 = vector.shape_cast %85 : vector<16x32xf32> to vector<1x16x32xf32>
    tpu.vector_store %arg7[%c0_32, %c0_33, %c0_34], %88 {strides = array<i32>} : memref<1x16x32xf32, #tpu.memory_space<vmem>>, vector<1x16x32xf32>,
    return
  }
  func.func @transform_0(%arg0: i32) -> (i32, i32, i32, i32) {
    %c0_i32 = arith.constant 0 : i32
    %c0_i32_0 = arith.constant 0 : i32
    %c0_i32_1 = arith.constant 0 : i32
    %c0_i32_2 = arith.constant 0 : i32
    return %arg0, %c0_i32, %c0_i32_0, %c0_i32_1 : i32, i32, i32, i32
  }
  func.func @transform_1(%arg0: i32) -> (i32, i32, i32, i32) {
    %c0_i32 = arith.constant 0 : i32
    %c0_i32_0 = arith.constant 0 : i32
    %c0_i32_1 = arith.constant 0 : i32
    %c0_i32_2 = arith.constant 0 : i32
    return %arg0, %c0_i32, %c0_i32_0, %c0_i32_1 : i32, i32, i32, i32
  }
  func.func @transform_2(%arg0: i32) -> (i32, i32, i32, i32) {
    %c0_i32 = arith.constant 0 : i32
    %c0_i32_0 = arith.constant 0 : i32
    %c0_i32_1 = arith.constant 0 : i32
    %c0_i32_2 = arith.constant 0 : i32
    return %arg0, %c0_i32, %c0_i32_0, %c0_i32_1 : i32, i32, i32, i32
  }
  func.func @transform_3(%arg0: i32) -> (i32, i32, i32) {
    %c0_i32 = arith.constant 0 : i32
    %c0_i32_0 = arith.constant 0 : i32
    %c0_i32_1 = arith.constant 0 : i32
    return %arg0, %c0_i32, %c0_i32_0 : i32, i32, i32
  }
  func.func @transform_4(%arg0: i32) -> (i32, i32) {
    %c0_i32 = arith.constant 0 : i32
    %c0_i32_0 = arith.constant 0 : i32
    %c0_i32_1 = arith.constant 0 : i32
    return %c0_i32, %c0_i32_0 : i32, i32
  }
  func.func @transform_5(%arg0: i32) -> (i32, i32) {
    %c0_i32 = arith.constant 0 : i32
    %c0_i32_0 = arith.constant 0 : i32
    %c0_i32_1 = arith.constant 0 : i32
    return %c0_i32, %c0_i32_0 : i32, i32
  }
  func.func @transform_6(%arg0: i32) -> (i32, i32, i32) {
    %c0_i32 = arith.constant 0 : i32
    %c0_i32_0 = arith.constant 0 : i32
    %c0_i32_1 = arith.constant 0 : i32
    return %arg0, %c0_i32, %c0_i32_0 : i32, i32, i32
  }
}

module attributes {stable_mosaic.version = 11 : i64} {
  func.func @_fc_block_ln_kernel(%arg0: i32, %arg1: memref<32x32xf32, #tpu.memory_space<vmem>>, %arg2: memref<32x32xbf16, #tpu.memory_space<vmem>>, %arg3: memref<1x32xf32, #tpu.memory_space<vmem>>, %arg4: memref<32x32xbf16, #tpu.memory_space<vmem>>, %arg5: memref<1x32xf32, #tpu.memory_space<vmem>>, %arg6: memref<1x32xf32, #tpu.memory_space<vmem>>, %arg7: memref<1x32xf32, #tpu.memory_space<vmem>>, %arg8: memref<32x32xf32, #tpu.memory_space<vmem>>) attributes {dimension_semantics = [#tpu.dimension_semantics<parallel>], iteration_bounds = array<i64: 1>, scalar_prefetch = 0 : i64, scratch_operands = 0 : i64, tpu.core_type = #tpu.core_type<tc>, window_params = [{transform_indices = @transform_0, window_bounds = array<i64: 32, 32>}, {pipeline_mode = #tpu.pipeline_mode<synchronous>, transform_indices = @transform_1, window_bounds = array<i64: 32, 32>}, {pipeline_mode = #tpu.pipeline_mode<synchronous>, transform_indices = @transform_2, window_bounds = array<i64: 1, 32>}, {pipeline_mode = #tpu.pipeline_mode<synchronous>, transform_indices = @transform_3, window_bounds = array<i64: 32, 32>}, {pipeline_mode = #tpu.pipeline_mode<synchronous>, transform_indices = @transform_4, window_bounds = array<i64: 1, 32>}, {pipeline_mode = #tpu.pipeline_mode<synchronous>, transform_indices = @transform_5, window_bounds = array<i64: 1, 32>}, {pipeline_mode = #tpu.pipeline_mode<synchronous>, transform_indices = @transform_6, window_bounds = array<i64: 1, 32>}, {transform_indices = @transform_7, window_bounds = array<i64: 32, 32>}]} {
    %c0 = arith.constant 0 : index
    %c0_0 = arith.constant 0 : index
    %0 = vector.load %arg1[%c0, %c0_0] : memref<32x32xf32, #tpu.memory_space<vmem>>, vector<32x32xf32>
    %1 = arith.truncf %0 : vector<32x32xf32> to vector<32x32xbf16>
    %c0_1 = arith.constant 0 : index
    %c0_2 = arith.constant 0 : index
    %2 = vector.load %arg2[%c0_1, %c0_2] : memref<32x32xbf16, #tpu.memory_space<vmem>>, vector<32x32xbf16>
    %cst = arith.constant dense<0.000000e+00> : vector<32x32xf32>
    %3 = tpu.matmul %1, %2, %cst {dimension_numbers = #tpu.dot_dimension_numbers<[1], [0], [0], [1], [0, 0, 1, 1], [], []>} : vector<32x32xbf16>, vector<32x32xbf16>, vector<32x32xf32> -> vector<32x32xf32>
    %c0_3 = arith.constant 0 : index
    %c0_4 = arith.constant 0 : index
    %4 = vector.load %arg3[%c0_3, %c0_4] : memref<1x32xf32, #tpu.memory_space<vmem>>, vector<1x32xf32>
    %5 = vector.broadcast %4 : vector<1x32xf32> to vector<32x32xf32>
    %6 = arith.addf %3, %5 : vector<32x32xf32>
    %cst_5 = arith.constant 0.000000e+00 : f32
    %7 = vector.broadcast %cst_5 : f32 to vector<32x32xf32>
    %8 = arith.maximumf %6, %7 : vector<32x32xf32>
    %9 = arith.truncf %8 : vector<32x32xf32> to vector<32x32xbf16>
    %c0_6 = arith.constant 0 : index
    %c0_7 = arith.constant 0 : index
    %10 = vector.load %arg4[%c0_6, %c0_7] : memref<32x32xbf16, #tpu.memory_space<vmem>>, vector<32x32xbf16>
    %cst_8 = arith.constant dense<0.000000e+00> : vector<32x32xf32>
    %11 = tpu.matmul %9, %10, %cst_8 {dimension_numbers = #tpu.dot_dimension_numbers<[1], [0], [0], [1], [0, 0, 1, 1], [], []>} : vector<32x32xbf16>, vector<32x32xbf16>, vector<32x32xf32> -> vector<32x32xf32>
    %c0_9 = arith.constant 0 : index
    %c0_10 = arith.constant 0 : index
    %12 = vector.load %arg5[%c0_9, %c0_10] : memref<1x32xf32, #tpu.memory_space<vmem>>, vector<1x32xf32>
    %13 = vector.broadcast %12 : vector<1x32xf32> to vector<32x32xf32>
    %14 = arith.addf %11, %13 : vector<32x32xf32>
    %cst_11 = arith.constant dense<0.000000e+00> : vector<32xf32>
    %15 = vector.multi_reduction <add>, %14, %cst_11 [1] : vector<32x32xf32> to vector<32xf32>
    %16 = vector.shape_cast %15 : vector<32xf32> to vector<32x1xf32>
    %cst_12 = arith.constant 3.200000e+01 : f32
    %17 = vector.broadcast %cst_12 : f32 to vector<32x1xf32>
    %18 = arith.divf %16, %17 : vector<32x1xf32>
    %19 = vector.broadcast %18 : vector<32x1xf32> to vector<32x32xf32>
    %20 = arith.subf %14, %19 : vector<32x32xf32>
    %21 = arith.mulf %20, %20 : vector<32x32xf32>
    %cst_13 = arith.constant dense<0.000000e+00> : vector<32xf32>
    %22 = vector.multi_reduction <add>, %21, %cst_13 [1] : vector<32x32xf32> to vector<32xf32>
    %23 = vector.shape_cast %22 : vector<32xf32> to vector<32x1xf32>
    %cst_14 = arith.constant 3.200000e+01 : f32
    %24 = vector.broadcast %cst_14 : f32 to vector<32x1xf32>
    %25 = arith.divf %23, %24 : vector<32x1xf32>
    %26 = vector.broadcast %18 : vector<32x1xf32> to vector<32x32xf32>
    %27 = arith.subf %14, %26 : vector<32x32xf32>
    %cst_15 = arith.constant 9.99999974E-6 : f32
    %28 = vector.broadcast %cst_15 : f32 to vector<32x1xf32>
    %29 = arith.addf %25, %28 : vector<32x1xf32>
    %30 = math.rsqrt %29 : vector<32x1xf32>
    %31 = vector.broadcast %30 : vector<32x1xf32> to vector<32x32xf32>
    %32 = arith.mulf %27, %31 : vector<32x32xf32>
    %c0_16 = arith.constant 0 : index
    %c0_17 = arith.constant 0 : index
    %33 = vector.load %arg6[%c0_16, %c0_17] : memref<1x32xf32, #tpu.memory_space<vmem>>, vector<1x32xf32>
    %34 = vector.broadcast %33 : vector<1x32xf32> to vector<32x32xf32>
    %35 = arith.mulf %32, %34 : vector<32x32xf32>
    %c0_18 = arith.constant 0 : index
    %c0_19 = arith.constant 0 : index
    %36 = vector.load %arg7[%c0_18, %c0_19] : memref<1x32xf32, #tpu.memory_space<vmem>>, vector<1x32xf32>
    %37 = vector.broadcast %36 : vector<1x32xf32> to vector<32x32xf32>
    %38 = arith.addf %35, %37 : vector<32x32xf32>
    %39 = arith.addf %38, %0 : vector<32x32xf32>
    %c0_20 = arith.constant 0 : index
    %c0_21 = arith.constant 0 : index
    %40 = vector.load %arg8[%c0_20, %c0_21] : memref<32x32xf32, #tpu.memory_space<vmem>>, vector<32x32xf32>
    tpu.vector_store %arg8[%c0_20, %c0_21], %39 {strides = array<i32>} : memref<32x32xf32, #tpu.memory_space<vmem>>, vector<32x32xf32>,
    return
  }
  func.func @transform_0(%arg0: i32) -> (i32, i32) {
    %c0_i32 = arith.constant 0 : i32
    %c0_i32_0 = arith.constant 0 : i32
    return %arg0, %c0_i32 : i32, i32
  }
  func.func @transform_1(%arg0: i32) -> (i32, i32) {
    %c0_i32 = arith.constant 0 : i32
    %c0_i32_0 = arith.constant 0 : i32
    %c0_i32_1 = arith.constant 0 : i32
    return %c0_i32, %c0_i32_0 : i32, i32
  }
  func.func @transform_2(%arg0: i32) -> (i32, i32) {
    %c0_i32 = arith.constant 0 : i32
    %c0_i32_0 = arith.constant 0 : i32
    %c0_i32_1 = arith.constant 0 : i32
    return %c0_i32, %c0_i32_0 : i32, i32
  }
  func.func @transform_3(%arg0: i32) -> (i32, i32) {
    %c0_i32 = arith.constant 0 : i32
    %c0_i32_0 = arith.constant 0 : i32
    %c0_i32_1 = arith.constant 0 : i32
    return %c0_i32, %c0_i32_0 : i32, i32
  }
  func.func @transform_4(%arg0: i32) -> (i32, i32) {
    %c0_i32 = arith.constant 0 : i32
    %c0_i32_0 = arith.constant 0 : i32
    %c0_i32_1 = arith.constant 0 : i32
    return %c0_i32, %c0_i32_0 : i32, i32
  }
  func.func @transform_5(%arg0: i32) -> (i32, i32) {
    %c0_i32 = arith.constant 0 : i32
    %c0_i32_0 = arith.constant 0 : i32
    %c0_i32_1 = arith.constant 0 : i32
    return %c0_i32, %c0_i32_0 : i32, i32
  }
  func.func @transform_6(%arg0: i32) -> (i32, i32) {
    %c0_i32 = arith.constant 0 : i32
    %c0_i32_0 = arith.constant 0 : i32
    %c0_i32_1 = arith.constant 0 : i32
    return %c0_i32, %c0_i32_0 : i32, i32
  }
  func.func @transform_7(%arg0: i32) -> (i32, i32) {
    %c0_i32 = arith.constant 0 : i32
    %c0_i32_0 = arith.constant 0 : i32
    return %arg0, %c0_i32 : i32, i32
  }
}

</mosaic_0001>

<llo_original>
// kernel: local_model_forward.6
$region0: #{local_model_forward.6}
  #allocation0 [shape = 'u32[]', space=smem, size = 0x4, offset = 0x4, fixed_abs, tag = 'smem constant byte address 0x4 - core index']
  #allocation1 [shape = 'u32[144,128]{1,0:T(1,128)}', space=vmem, size = 0x12000, scoped, tag = 'internal scratch']
  #allocation2 [shape = 'f32[32,96]{1,0:T(8,128)}', space=vmem, size = 0x4000, scoped, tag = 'scratch operand']
  %s0 = inlined_call_operand.vmem [shape: f32[32,32], index: 0, kind: input, shape index: {}]
  %s1 = inlined_call_operand.vmem [shape: bf16[32,96], index: 1, kind: input, shape index: {}]
  %s2 = inlined_call_operand.vmem [shape: f32[1,96], index: 2, kind: input, shape index: {}]
  %s3 = inlined_call_operand.vmem [shape: bf16[32,96], index: 3, kind: output, shape index: {}]
  %s4 = sld [smem:[#allocation0]]
  $region30: #{local_model_forward.6} parent=0
    _
  %s6 = ssub.s32 1, %s4
  %s7 = scalar_select 0, %s6, %s4
  // Predicated region
  $region2: #{local_model_forward.6} parent=0 // pred_check
    _
  $region3: #{local_model_forward.6} parent=0 // pred_check_branch
    %9 = sbr.rel (0) target = $region5
  $region4: #{local_model_forward.6} parent=0 // pred_region
    _
  $region5: #{local_model_forward.6} parent=0 // pred_fallthru
    _
  // Predicated region
  $region6: #{local_model_forward.6} parent=0 // pred_check
    _
  $region7: #{local_model_forward.6} parent=0 // pred_check_branch
    %11 = sbr.rel (0) target = $region9
  $region8: #{local_model_forward.6} parent=0 // pred_region
    _
  $region9: #{local_model_forward.6} parent=0 // pred_fallthru
    _
  // Predicated region
  $region10: #{local_model_forward.6} parent=0 // pred_check
    _
  $region11: #{local_model_forward.6} parent=0 // pred_check_branch
    %13 = sbr.rel (0) target = $region13
  $region12: #{local_model_forward.6} parent=0 // pred_region
    _
  $region13: #{local_model_forward.6} parent=0 // pred_fallthru
    _
  %p15 = scmp.eq.s32.totalorder 0, 0
  // Predicated region
  $region14: #{local_model_forward.6} parent=0 // pred_check
    %p16 = pneg %p15
  $region15: #{local_model_forward.6} parent=0 // pred_check_branch
    %18 = sbr.rel (%p16) target = $region17
  $region16: #{local_model_forward.6} parent=0 // pred_region
    %vm19 = vcmask 785408
    %20 = vst.msk [vmem:[#allocation2] sm:$0xff] %vm19, 0.0
    %21 = vst.msk [vmem:[#allocation2 + $0x8] sm:$0xff] %vm19, 0.0
    %22 = vst.msk [vmem:[#allocation2 + $0x10] sm:$0xff] %vm19, 0.0
    %23 = vst.msk [vmem:[#allocation2 + $0x18] sm:$0xff] %vm19, 0.0
  $region17: #{local_model_forward.6} parent=0 // pred_fallthru
    _
  %v24 = vld [vmem:[#allocation2] sm:$0xff]
  %v25 = vld [vmem:[#allocation2 + $0x8] sm:$0xff]
  %v26 = vld [vmem:[#allocation2 + $0x10] sm:$0xff]
  %v27 = vld [vmem:[#allocation2 + $0x18] sm:$0xff]
  %v28 = vld [vmem:[%s0] sm:$0xff]
  %v29 = vld [vmem:[%s0 + $0x8] sm:$0xff]
  %v30 = vld [vmem:[%s0 + $0x10] sm:$0xff]
  %v31 = vld [vmem:[%s0 + $0x18] sm:$0xff]
  %v32 = vpack.c.bf16 %v29, %v28
  %v33 = vpack.c.bf16 %v31, %v30
  %v34 = vld [vmem:[%s1] sm:$0xf]
  %v35 = vld [vmem:[%s1 + $0x4] sm:$0xf]
  %v36 = vld [vmem:[%s1 + $0x8] sm:$0xf]
  %v37 = vld [vmem:[%s1 + $0xc] sm:$0xf]
  %v42 = vunpack.c.l.b16 %v34
  %v43 = vunpack.c.l.b16 %v35
  %v44 = vunpack.c.l.b16 %v36
  %v45 = vunpack.c.l.b16 %v37
  %v46 = vpack.c.b16 %v43, %v42
  %v47 = vpack.c.b16 %v45, %v44
  %vm50 = vcmask 261120
  %v52 = vsel %vm50, %v32, 0
  %v55 = vsel %vm50, %v33, 0
  %57 = vmatprep.subr.bf16.mxu0 0
  %58 = vmatpush1.bf16.msra.mxu0 0
  %59 = vmatprep.subr.bf16.mxu0 0
  %60 = vmatpush1.bf16.msra.mxu0 0
  %61 = vmatprep.subr.bf16.mxu0 0
  %62 = vmatpush1.bf16.msra.mxu0 0
  %63 = vmatprep.subr.bf16.mxu0 0
  %64 = vmatpush1.bf16.msra.mxu0 0
  %65 = vmatprep.subr.bf16.mxu0 0
  %66 = vmatpush1.bf16.msra.mxu0 0
  %67 = vmatprep.subr.bf16.mxu0 0
  %68 = vmatpush1.bf16.msra.mxu0 0
  %69 = vmatprep.subr.bf16.mxu0 0
  %70 = vmatpush1.bf16.msra.mxu0 %v47
  %71 = vmatprep.subr.bf16.mxu0 0
  %72 = vmatpush1.bf16.msra.mxu0 %v46
  %73 = vmatprep.subr.bf16.mxu0 0
  %74 = vmatpush2.bf16.msra.mxu0 0
  %75 = vmatprep.subr.bf16.mxu0 0
  %76 = vmatpush2.bf16.msra.mxu0 0
  %77 = vmatprep.subr.bf16.mxu0 0
  %78 = vmatpush2.bf16.msra.mxu0 0
  %79 = vmatprep.subr.bf16.mxu0 0
  %80 = vmatpush2.bf16.msra.mxu0 0
  %81 = vmatprep.subr.bf16.mxu0 0
  %82 = vmatpush2.bf16.msra.mxu0 0
  %83 = vmatprep.subr.bf16.mxu0 0
  %84 = vmatpush2.bf16.msra.mxu0 0
  %85 = vmatprep.subr.bf16.mxu0 0
  %86 = vmatpush2.bf16.msra.mxu0 0
  %87 = vmatprep.subr.bf16.mxu0 0
  %88 = vmatpush2.bf16.msra.mxu0 0
  %89 = vmatprep.mubr.bf16.mxu0 0
  %90 = vmatmul.mubr.bf16.gmra.mxu0 %v52
  %v91 = vpop.f32.mrf.mxu0
  %v92 = vadd.f32 0.0, %v91
  %v93 = vpop.f32.mrf.mxu0
  %v94 = vpop.f32.mrf.mxu0
  %v95 = vadd.f32 0.0, %v94
  %v96 = vpop.f32.mrf.mxu0
  %97 = vmatprep.mubr.bf16.mxu0 0
  %98 = vmatmul.mubr.bf16.gmra.mxu0 %v55
  %v99 = vpop.f32.mrf.mxu0
  %v100 = vadd.f32 0.0, %v99
  %v101 = vpop.f32.mrf.mxu0
  %v102 = vpop.f32.mrf.mxu0
  %v103 = vadd.f32 0.0, %v102
  %v104 = vpop.f32.mrf.mxu0
  %105 = vdwg.mxu0
  %v106 = vadd.f32 %v24, %v92
  %v107 = vadd.f32 %v25, %v95
  %v108 = vadd.f32 %v26, %v100
  %v109 = vadd.f32 %v27, %v103
  %vm110 = vcmask 785408
  %111 = vst.msk [vmem:[#allocation2] sm:$0xff] %vm110, %v106
  %112 = vst.msk [vmem:[#allocation2 + $0x8] sm:$0xff] %vm110, %v107
  %113 = vst.msk [vmem:[#allocation2 + $0x10] sm:$0xff] %vm110, %v108
  %114 = vst.msk [vmem:[#allocation2 + $0x18] sm:$0xff] %vm110, %v109
  // Predicated region
  $region18: #{local_model_forward.6} parent=0 // pred_check
    %p115 = pneg %p15
  $region19: #{local_model_forward.6} parent=0 // pred_check_branch
    %117 = sbr.rel (%p115) target = $region21
  $region20: #{local_model_forward.6} parent=0 // pred_region
    %v118 = vld [vmem:[#allocation2] sm:$0xff]
    %v119 = vld [vmem:[#allocation2 + $0x8] sm:$0xff]
    %v120 = vld [vmem:[#allocation2 + $0x10] sm:$0xff]
    %v121 = vld [vmem:[#allocation2 + $0x18] sm:$0xff]
    %v122 = vld [vmem:[%s2] sm:$0x1]
    %v124 = vlaneseq
    %v125 = vshrl.u32 %v124, 7
    %v126 = vsub.s32 0, %v125
    %v127 = vrot.slane %v122, %v126
    %v129 = vadd.f32 %v118, %v127
    %v130 = vadd.f32 %v119, %v127
    %v131 = vadd.f32 %v120, %v127
    %v132 = vadd.f32 %v121, %v127
    %v133 = vpack.c.bf16 %v130, %v129
    %v134 = vpack.c.bf16 %v132, %v131
    %v137 = vunpack.c.l.b16 %v133
    %v138 = vunpack.c.h.b16 %v133
    %v139 = vunpack.c.l.b16 %v134
    %v140 = vunpack.c.h.b16 %v134
    %v141 = vpack.c.b16 %v137, %v137
    %v142 = vpack.c.b16 %v138, %v138
    %v143 = vpack.c.b16 %v139, %v139
    %v144 = vpack.c.b16 %v140, %v140
    %vm149 = vcmask 781312
    %150 = vst.msk [vmem:[%s3] sm:$0xf] %vm149, %v141
    %151 = vst.msk [vmem:[%s3 + $0x4] sm:$0xf] %vm149, %v142
    %152 = vst.msk [vmem:[%s3 + $0x8] sm:$0xf] %vm149, %v143
    %153 = vst.msk [vmem:[%s3 + $0xc] sm:$0xf] %vm149, %v144
  $region21: #{local_model_forward.6} parent=0 // pred_fallthru
    _
  // Predicated region
  $region22: #{local_model_forward.6} parent=0 // pred_check
    _
  $region23: #{local_model_forward.6} parent=0 // pred_check_branch
    %155 = sbr.rel (0) target = $region25
  $region24: #{local_model_forward.6} parent=0 // pred_region
    _
  $region25: #{local_model_forward.6} parent=0 // pred_fallthru
    _
  // Predicated region
  $region26: #{local_model_forward.6} parent=0 // pred_check
    _
  $region27: #{local_model_forward.6} parent=0 // pred_check_branch
    %157 = sbr.rel (0) target = $region29
  $region28: #{local_model_forward.6} parent=0 // pred_region
    _
  $region29: #{local_model_forward.6} parent=0 // pred_fallthru
    _

// kernel: local_model_forward.8
$region0: #{local_model_forward.8}
  #allocation0 [shape = 'u32[]', space=smem, size = 0x4, offset = 0x4, fixed_abs, tag = 'smem constant byte address 0x4 - core index']
  #allocation1 [shape = 'u32[144,128]{1,0:T(1,128)}', space=vmem, size = 0x12000, scoped, tag = 'internal scratch']
  %s0 = inlined_call_operand.vmem [shape: f32[32,32], index: 0, kind: input, shape index: {}]
  %s1 = inlined_call_operand.vmem [shape: bf16[32,32], index: 1, kind: input, shape index: {}]
  %s2 = inlined_call_operand.vmem [shape: f32[1,32], index: 2, kind: input, shape index: {}]
  %s3 = inlined_call_operand.vmem [shape: bf16[32,32], index: 3, kind: input, shape index: {}]
  %s4 = inlined_call_operand.vmem [shape: f32[1,32], index: 4, kind: input, shape index: {}]
  %s5 = inlined_call_operand.vmem [shape: f32[1,32], index: 5, kind: input, shape index: {}]
  %s6 = inlined_call_operand.vmem [shape: f32[1,32], index: 6, kind: input, shape index: {}]
  %s7 = inlined_call_operand.vmem [shape: f32[32,32], index: 7, kind: output, shape index: {}]
  %s8 = sld [smem:[#allocation0]]
  $region38: #{local_model_forward.8} parent=0
    _
  %s10 = ssub.s32 1, %s8
  %s11 = scalar_select 0, %s10, %s8
  // Predicated region
  $region2: #{local_model_forward.8} parent=0 // pred_check
    _
  $region3: #{local_model_forward.8} parent=0 // pred_check_branch
    %13 = sbr.rel (0) target = $region5
  $region4: #{local_model_forward.8} parent=0 // pred_region
    _
  $region5: #{local_model_forward.8} parent=0 // pred_fallthru
    _
  // Predicated region
  $region6: #{local_model_forward.8} parent=0 // pred_check
    _
  $region7: #{local_model_forward.8} parent=0 // pred_check_branch
    %15 = sbr.rel (0) target = $region9
  $region8: #{local_model_forward.8} parent=0 // pred_region
    _
  $region9: #{local_model_forward.8} parent=0 // pred_fallthru
    _
  // Predicated region
  $region10: #{local_model_forward.8} parent=0 // pred_check
    _
  $region11: #{local_model_forward.8} parent=0 // pred_check_branch
    %17 = sbr.rel (0) target = $region13
  $region12: #{local_model_forward.8} parent=0 // pred_region
    _
  $region13: #{local_model_forward.8} parent=0 // pred_fallthru
    _
  // Predicated region
  $region14: #{local_model_forward.8} parent=0 // pred_check
    _
  $region15: #{local_model_forward.8} parent=0 // pred_check_branch
    %19 = sbr.rel (0) target = $region17
  $region16: #{local_model_forward.8} parent=0 // pred_region
    _
  $region17: #{local_model_forward.8} parent=0 // pred_fallthru
    _
  // Predicated region
  $region18: #{local_model_forward.8} parent=0 // pred_check
    _
  $region19: #{local_model_forward.8} parent=0 // pred_check_branch
    %21 = sbr.rel (0) target = $region21
  $region20: #{local_model_forward.8} parent=0 // pred_region
    _
  $region21: #{local_model_forward.8} parent=0 // pred_fallthru
    _
  // Predicated region
  $region22: #{local_model_forward.8} parent=0 // pred_check
    _
  $region23: #{local_model_forward.8} parent=0 // pred_check_branch
    %23 = sbr.rel (0) target = $region25
  $region24: #{local_model_forward.8} parent=0 // pred_region
    _
  $region25: #{local_model_forward.8} parent=0 // pred_fallthru
    _
  // Predicated region
  $region26: #{local_model_forward.8} parent=0 // pred_check
    _
  $region27: #{local_model_forward.8} parent=0 // pred_check_branch
    %25 = sbr.rel (0) target = $region29
  $region28: #{local_model_forward.8} parent=0 // pred_region
    _
  $region29: #{local_model_forward.8} parent=0 // pred_fallthru
    _
  %v27 = vld [vmem:[%s0] sm:$0xff]
  %v28 = vld [vmem:[%s0 + $0x8] sm:$0xff]
  %v29 = vld [vmem:[%s0 + $0x10] sm:$0xff]
  %v30 = vld [vmem:[%s0 + $0x18] sm:$0xff]
  %v31 = vpack.c.bf16 %v28, %v27
  %v32 = vpack.c.bf16 %v30, %v29
  %v33 = vld [vmem:[%s1] sm:$0xf]
  %v34 = vld [vmem:[%s1 + $0x4] sm:$0xf]
  %v35 = vld [vmem:[%s1 + $0x8] sm:$0xf]
  %v36 = vld [vmem:[%s1 + $0xc] sm:$0xf]
  %v37 = vld [vmem:[%s2] sm:$0x1]
  %v39 = vlaneseq
  %v40 = vshrl.u32 %v39, 7
  %v41 = vsub.s32 0, %v40
  %v42 = vrot.slane %v37, %v41
  %v48 = vunpack.c.l.b16 %v33
  %v49 = vunpack.c.l.b16 %v34
  %v50 = vunpack.c.l.b16 %v35
  %v51 = vunpack.c.l.b16 %v36
  %v52 = vpack.c.b16 %v49, %v48
  %v53 = vpack.c.b16 %v51, %v50
  %vm56 = vcmask 261120
  %v58 = vsel %vm56, %v31, 0
  %v61 = vsel %vm56, %v32, 0
  %63 = vmatprep.subr.bf16.mxu0 0
  %64 = vmatpush1.bf16.msra.mxu0 0
  %65 = vmatprep.subr.bf16.mxu0 0
  %66 = vmatpush1.bf16.msra.mxu0 0
  %67 = vmatprep.subr.bf16.mxu0 0
  %68 = vmatpush1.bf16.msra.mxu0 0
  %69 = vmatprep.subr.bf16.mxu0 0
  %70 = vmatpush1.bf16.msra.mxu0 0
  %71 = vmatprep.subr.bf16.mxu0 0
  %72 = vmatpush1.bf16.msra.mxu0 0
  %73 = vmatprep.subr.bf16.mxu0 0
  %74 = vmatpush1.bf16.msra.mxu0 0
  %75 = vmatprep.subr.bf16.mxu0 0
  %76 = vmatpush1.bf16.msra.mxu0 %v53
  %77 = vmatprep.subr.bf16.mxu0 0
  %78 = vmatpush1.bf16.msra.mxu0 %v52
  %79 = vmatprep.subr.bf16.mxu0 0
  %80 = vmatpush2.bf16.msra.mxu0 0
  %81 = vmatprep.subr.bf16.mxu0 0
  %82 = vmatpush2.bf16.msra.mxu0 0
  %83 = vmatprep.subr.bf16.mxu0 0
  %84 = vmatpush2.bf16.msra.mxu0 0
  %85 = vmatprep.subr.bf16.mxu0 0
  %86 = vmatpush2.bf16.msra.mxu0 0
  %87 = vmatprep.subr.bf16.mxu0 0
  %88 = vmatpush2.bf16.msra.mxu0 0
  %89 = vmatprep.subr.bf16.mxu0 0
  %90 = vmatpush2.bf16.msra.mxu0 0
  %91 = vmatprep.subr.bf16.mxu0 0
  %92 = vmatpush2.bf16.msra.mxu0 0
  %93 = vmatprep.subr.bf16.mxu0 0
  %94 = vmatpush2.bf16.msra.mxu0 0
  %95 = vmatprep.mubr.bf16.mxu0 0
  %96 = vmatmul.mubr.bf16.gmra.mxu0 %v58
  %v97 = vpop.f32.mrf.mxu0
  %v98 = vadd.f32 %v42, %v97
  %v99 = vpop.f32.mrf.mxu0
  %v100 = vpop.f32.mrf.mxu0
  %v101 = vadd.f32 %v42, %v100
  %v102 = vpop.f32.mrf.mxu0
  %103 = vmatprep.mubr.bf16.mxu0 0
  %104 = vmatmul.mubr.bf16.gmra.mxu0 %v61
  %v105 = vpop.f32.mrf.mxu0
  %v106 = vadd.f32 %v42, %v105
  %v107 = vpop.f32.mrf.mxu0
  %v108 = vpop.f32.mrf.mxu0
  %v109 = vadd.f32 %v42, %v108
  %v110 = vpop.f32.mrf.mxu0
  %111 = vdwg.mxu0
  %v112 = vmax.f32 %v98, 0.0
  %v113 = vmax.f32 %v101, 0.0
  %v114 = vmax.f32 %v106, 0.0
  %v115 = vmax.f32 %v109, 0.0
  %v116 = vpack.c.bf16 %v113, %v112
  %v117 = vpack.c.bf16 %v115, %v114
  %v118 = vld [vmem:[%s3] sm:$0xf]
  %v119 = vld [vmem:[%s3 + $0x4] sm:$0xf]
  %v120 = vld [vmem:[%s3 + $0x8] sm:$0xf]
  %v121 = vld [vmem:[%s3 + $0xc] sm:$0xf]
  %v122 = vld [vmem:[%s4] sm:$0x1]
  %v124 = vlaneseq
  %v125 = vshrl.u32 %v124, 7
  %v126 = vsub.s32 0, %v125
  %v127 = vrot.slane %v122, %v126
  %v133 = vunpack.c.l.b16 %v118
  %v134 = vunpack.c.l.b16 %v119
  %v135 = vunpack.c.l.b16 %v120
  %v136 = vunpack.c.l.b16 %v121
  %v137 = vpack.c.b16 %v134, %v133
  %v138 = vpack.c.b16 %v136, %v135
  %v142 = vsel %vm56, %v116, 0
  %v145 = vsel %vm56, %v117, 0
  %147 = vmatprep.subr.bf16.mxu0 0
  %148 = vmatpush1.bf16.msra.mxu0 0
  %149 = vmatprep.subr.bf16.mxu0 0
  %150 = vmatpush1.bf16.msra.mxu0 0
  %151 = vmatprep.subr.bf16.mxu0 0
  %152 = vmatpush1.bf16.msra.mxu0 0
  %153 = vmatprep.subr.bf16.mxu0 0
  %154 = vmatpush1.bf16.msra.mxu0 0
  %155 = vmatprep.subr.bf16.mxu0 0
  %156 = vmatpush1.bf16.msra.mxu0 0
  %157 = vmatprep.subr.bf16.mxu0 0
  %158 = vmatpush1.bf16.msra.mxu0 0
  %159 = vmatprep.subr.bf16.mxu0 0
  %160 = vmatpush1.bf16.msra.mxu0 %v138
  %161 = vmatprep.subr.bf16.mxu0 0
  %162 = vmatpush1.bf16.msra.mxu0 %v137
  %163 = vmatprep.subr.bf16.mxu0 0
  %164 = vmatpush2.bf16.msra.mxu0 0
  %165 = vmatprep.subr.bf16.mxu0 0
  %166 = vmatpush2.bf16.msra.mxu0 0
  %167 = vmatprep.subr.bf16.mxu0 0
  %168 = vmatpush2.bf16.msra.mxu0 0
  %169 = vmatprep.subr.bf16.mxu0 0
  %170 = vmatpush2.bf16.msra.mxu0 0
  %171 = vmatprep.subr.bf16.mxu0 0
  %172 = vmatpush2.bf16.msra.mxu0 0
  %173 = vmatprep.subr.bf16.mxu0 0
  %174 = vmatpush2.bf16.msra.mxu0 0
  %175 = vmatprep.subr.bf16.mxu0 0
  %176 = vmatpush2.bf16.msra.mxu0 0
  %177 = vmatprep.subr.bf16.mxu0 0
  %178 = vmatpush2.bf16.msra.mxu0 0
  %179 = vmatprep.mubr.bf16.mxu0 0
  %180 = vmatmul.mubr.bf16.gmra.mxu0 %v142
  %v181 = vpop.f32.mrf.mxu0
  %v182 = vadd.f32 %v127, %v181
  %v183 = vpop.f32.mrf.mxu0
  %v184 = vpop.f32.mrf.mxu0
  %v185 = vadd.f32 %v127, %v184
  %v186 = vpop.f32.mrf.mxu0
  %187 = vmatprep.mubr.bf16.mxu0 0
  %188 = vmatmul.mubr.bf16.gmra.mxu0 %v145
  %v189 = vpop.f32.mrf.mxu0
  %v190 = vadd.f32 %v127, %v189
  %v191 = vpop.f32.mrf.mxu0
  %v192 = vpop.f32.mrf.mxu0
  %v193 = vadd.f32 %v127, %v192
  %v194 = vpop.f32.mrf.mxu0
  %195 = vdwg.mxu0
  %v196 = vsel %vm56, %v182, 0.0
  %197 = vadd.xlane.f32.xlu0 %v196
  %v198 = vpop.xlane.xlu0 %197
  %v199 = vsel %vm56, %v185, 0.0
  %200 = vadd.xlane.f32.xlu0 %v199
  %v201 = vpop.xlane.xlu0 %200
  %v202 = vsel %vm56, %v190, 0.0
  %203 = vadd.xlane.f32.xlu0 %v202
  %v204 = vpop.xlane.xlu0 %203
  %v205 = vsel %vm56, %v193, 0.0
  %206 = vadd.xlane.f32.xlu0 %v205
  %v207 = vpop.xlane.xlu0 %206
  %v208 = vrcp.pop 32.0
  %v209 = vmul.f32 %v198, %v208
  %v210 = vmul.f32 %v201, %v208
  %v211 = vmul.f32 %v204, %v208
  %v212 = vmul.f32 %v207, %v208
  %v213 = vsub.f32 %v182, %v209
  %v214 = vsub.f32 %v185, %v210
  %v215 = vsub.f32 %v190, %v211
  %v216 = vsub.f32 %v193, %v212
  %v217 = vmul.f32 %v213, %v213
  %v218 = vmul.f32 %v214, %v214
  %v219 = vmul.f32 %v215, %v215
  %v220 = vmul.f32 %v216, %v216
  %v221 = vsel %vm56, %v217, 0.0
  %222 = vadd.xlane.f32.xlu0 %v221
  %v223 = vpop.xlane.xlu0 %222
  %v224 = vsel %vm56, %v218, 0.0
  %225 = vadd.xlane.f32.xlu0 %v224
  %v226 = vpop.xlane.xlu0 %225
  %v227 = vsel %vm56, %v219, 0.0
  %228 = vadd.xlane.f32.xlu0 %v227
  %v229 = vpop.xlane.xlu0 %228
  %v230 = vsel %vm56, %v220, 0.0
  %231 = vadd.xlane.f32.xlu0 %v230
  %v232 = vpop.xlane.xlu0 %231
  %v233 = vmul.f32 %v223, %v208
  %v234 = vmul.f32 %v226, %v208
  %v235 = vmul.f32 %v229, %v208
  %v236 = vmul.f32 %v232, %v208
  %v237 = vadd.f32 %v233, 1e-05
  %v238 = vadd.f32 %v234, 1e-05
  %v239 = vadd.f32 %v235, 1e-05
  %v240 = vadd.f32 %v236, 1e-05
  %v241 = vrsqrt.pop %v237
  %v242 = vrsqrt.pop %v238
  %v243 = vrsqrt.pop %v239
  %v244 = vrsqrt.pop %v240
  %v245 = vmul.f32 %v213, %v241
  %v246 = vmul.f32 %v214, %v242
  %v247 = vmul.f32 %v215, %v243
  %v248 = vmul.f32 %v216, %v244
  %v249 = vld [vmem:[%s5] sm:$0x1]
  %v251 = vlaneseq
  %v252 = vshrl.u32 %v251, 7
  %v253 = vsub.s32 0, %v252
  %v254 = vrot.slane %v249, %v253
  %v256 = vmul.f32 %v245, %v254
  %v257 = vmul.f32 %v246, %v254
  %v258 = vmul.f32 %v247, %v254
  %v259 = vmul.f32 %v248, %v254
  %v260 = vld [vmem:[%s6] sm:$0x1]
  %v262 = vlaneseq
  %v263 = vshrl.u32 %v262, 7
  %v264 = vsub.s32 0, %v263
  %v265 = vrot.slane %v260, %v264
  %v267 = vadd.f32 %v256, %v265
  %v268 = vadd.f32 %v257, %v265
  %v269 = vadd.f32 %v258, %v265
  %v270 = vadd.f32 %v259, %v265
  %v271 = vadd.f32 %v267, %v27
  %v272 = vadd.f32 %v268, %v28
  %v273 = vadd.f32 %v269, %v29
  %v274 = vadd.f32 %v270, %v30
  %275 = vst.msk [vmem:[%s7] sm:$0xff] %vm56, %v271
  %276 = vst.msk [vmem:[%s7 + $0x8] sm:$0xff] %vm56, %v272
  %277 = vst.msk [vmem:[%s7 + $0x10] sm:$0xff] %vm56, %v273
  %278 = vst.msk [vmem:[%s7 + $0x18] sm:$0xff] %vm56, %v274
  // Predicated region
  $region30: #{local_model_forward.8} parent=0 // pred_check
    _
  $region31: #{local_model_forward.8} parent=0 // pred_check_branch
    %280 = sbr.rel (0) target = $region33
  $region32: #{local_model_forward.8} parent=0 // pred_region
    _
  $region33: #{local_model_forward.8} parent=0 // pred_fallthru
    _
  // Predicated region
  $region34: #{local_model_forward.8} parent=0 // pred_check
    _
  $region35: #{local_model_forward.8} parent=0 // pred_check_branch
    %282 = sbr.rel (0) target = $region37
  $region36: #{local_model_forward.8} parent=0 // pred_region
    _
  $region37: #{local_model_forward.8} parent=0 // pred_fallthru
    _

// kernel: local_model_forward.7
$region0: #{local_model_forward.7}
  #allocation0 [shape = 'u32[]', space=smem, size = 0x4, offset = 0x4, fixed_abs, tag = 'smem constant byte address 0x4 - core index']
  #allocation1 [shape = 'u32[144,128]{1,0:T(1,128)}', space=vmem, size = 0x12000, scoped, tag = 'internal scratch']
  %s0 = inlined_call_operand.vmem [shape: bf16[2,4,16,8], index: 0, kind: input, shape index: {}]
  %s1 = inlined_call_operand.vmem [shape: bf16[2,4,16,8], index: 1, kind: input, shape index: {}]
  %s2 = inlined_call_operand.vmem [shape: bf16[2,4,16,8], index: 2, kind: input, shape index: {}]
  %s3 = inlined_call_operand.vmem [shape: f32[2,16,32], index: 3, kind: input, shape index: {}]
  %s4 = inlined_call_operand.vmem [shape: f32[1,32], index: 4, kind: input, shape index: {}]
  %s5 = inlined_call_operand.vmem [shape: f32[1,32], index: 5, kind: input, shape index: {}]
  %s6 = inlined_call_operand.vmem [shape: f32[2,16,32], index: 6, kind: output, shape index: {}]
  %s7 = sld [smem:[#allocation0]]
  $region57: #{local_model_forward.7} parent=0
    _
  %s9 = ssub.s32 1, %s7
  %s10 = scalar_select 0, %s9, %s7
  loop: start=0, step=1, limit=4
  $region2: #{local_model_forward.7} parent=0 // loop_pre_header
    _
  $region3: #{local_model_forward.7} parent=0 // loop_header
    %s12 = sphi 0, %s16
    %p13 = scmp.ge.s32.totalorder %s12, 4
    %s22 = sphi 0, %s24
    %s25 = sphi 0, %s22
    %s26 = sphi 0, %s25
    %s42 = sphi 0, %s26
    %s48 = sphi 0, %s50
    %s51 = sphi 0, %s48
    %s52 = sphi 0, %s51
    %s68 = sphi 0, %s52
    %s74 = sphi 0, %s76
    %s77 = sphi 0, %s74
    %s78 = sphi 0, %s77
    %s94 = sphi 0, %s78
    %s100 = sphi 0, %s102
    %s103 = sphi 0, %s100
    %s104 = sphi 0, %s103
    %s120 = sphi 0, %s104
    %s124 = sphi 0, %s124
    %s126 = sphi 0, %s124
    %s127 = sphi 0, %s126
    %s141 = sphi 0, %s127
    %s145 = sphi 0, %s145
    %s147 = sphi 0, %s145
    %s148 = sphi 0, %s147
    %s162 = sphi 0, %s148
    %s168 = sphi 0, %s170
    %s171 = sphi 0, %s168
    %s172 = sphi 0, %s171
    %s188 = sphi 0, %s172
  $region4: #{local_model_forward.7} parent=0 // loop_header_branch
    %15 = sbr.rel (%p13) target = $region8
  $region5: #{local_model_forward.7} parent=0 // loop_body
    %s17 = ssub.s32 %s12, 1
    %s18 = ssub.s32 %s12, 2
    %s19 = sadd.s32 %s12, 1
    %s20 = ssub.s32 %s12, %s19
    %p21 = scmp.eq.s32.totalorder %s20, 0
    %s23 = sadd.s32 %s22, 1
    %s24 = scalar_select %p21, %s22, %s23
    %p27 = pneg %p21
    %p28 = scmp.eq.s32.totalorder %s12, 1
    %p29 = por %p27, %p28
    %p30 = scmp.ne.s32.totalorder %s22, %s25
    %p31 = scmp.eq.s32.totalorder %s12, 0
    %p32 = por %p30, %p31
    %p33 = scmp.ne.s32.totalorder %s22, %s25
    %p34 = scmp.eq.s32.totalorder %s17, 1
    %p35 = por %p33, %p34
    %p36 = scmp.ne.s32.totalorder %s25, %s26
    %p37 = scmp.eq.s32.totalorder %s17, 0
    %p38 = por %p36, %p37
    %p39 = scmp.ne.s32.totalorder %s25, %s26
    %p40 = scmp.eq.s32.totalorder %s18, 1
    %p41 = por %p39, %p40
    %p43 = scmp.ne.s32.totalorder %s26, %s42
    %p44 = scmp.eq.s32.totalorder %s18, 0
    %p45 = por %p43, %p44
    %s46 = ssub.s32 %s12, %s19
    %p47 = scmp.eq.s32.totalorder %s46, 0
    %s49 = sadd.s32 %s48, 1
    %s50 = scalar_select %p47, %s48, %s49
    %p53 = pneg %p47
    %p54 = scmp.eq.s32.totalorder %s12, 1
    %p55 = por %p53, %p54
    %p56 = scmp.ne.s32.totalorder %s48, %s51
    %p57 = scmp.eq.s32.totalorder %s12, 0
    %p58 = por %p56, %p57
    %p59 = scmp.ne.s32.totalorder %s48, %s51
    %p60 = scmp.eq.s32.totalorder %s17, 1
    %p61 = por %p59, %p60
    %p62 = scmp.ne.s32.totalorder %s51, %s52
    %p63 = scmp.eq.s32.totalorder %s17, 0
    %p64 = por %p62, %p63
    %p65 = scmp.ne.s32.totalorder %s51, %s52
    %p66 = scmp.eq.s32.totalorder %s18, 1
    %p67 = por %p65, %p66
    %p69 = scmp.ne.s32.totalorder %s52, %s68
    %p70 = scmp.eq.s32.totalorder %s18, 0
    %p71 = por %p69, %p70
    %s72 = ssub.s32 %s12, %s19
    %p73 = scmp.eq.s32.totalorder %s72, 0
    %s75 = sadd.s32 %s74, 1
    %s76 = scalar_select %p73, %s74, %s75
    %p79 = pneg %p73
    %p80 = scmp.eq.s32.totalorder %s12, 1
    %p81 = por %p79, %p80
    %p82 = scmp.ne.s32.totalorder %s74, %s77
    %p83 = scmp.eq.s32.totalorder %s12, 0
    %p84 = por %p82, %p83
    %p85 = scmp.ne.s32.totalorder %s74, %s77
    %p86 = scmp.eq.s32.totalorder %s17, 1
    %p87 = por %p85, %p86
    %p88 = scmp.ne.s32.totalorder %s77, %s78
    %p89 = scmp.eq.s32.totalorder %s17, 0
    %p90 = por %p88, %p89
    %p91 = scmp.ne.s32.totalorder %s77, %s78
    %p92 = scmp.eq.s32.totalorder %s18, 1
    %p93 = por %p91, %p92
    %p95 = scmp.ne.s32.totalorder %s78, %s94
    %p96 = scmp.eq.s32.totalorder %s18, 0
    %p97 = por %p95, %p96
    %s98 = ssub.s32 %s12, %s19
    %p99 = scmp.eq.s32.totalorder %s98, 0
    %s101 = sadd.s32 %s100, 1
    %s102 = scalar_select %p99, %s100, %s101
    %p105 = pneg %p99
    %p106 = scmp.eq.s32.totalorder %s12, 1
    %p107 = por %p105, %p106
    %p108 = scmp.ne.s32.totalorder %s100, %s103
    %p109 = scmp.eq.s32.totalorder %s12, 0
    %p110 = por %p108, %p109
    %p111 = scmp.ne.s32.totalorder %s100, %s103
    %p112 = scmp.eq.s32.totalorder %s17, 1
    %p113 = por %p111, %p112
    %p114 = scmp.ne.s32.totalorder %s103, %s104
    %p115 = scmp.eq.s32.totalorder %s17, 0
    %p116 = por %p114, %p115
    %p117 = scmp.ne.s32.totalorder %s103, %s104
    %p118 = scmp.eq.s32.totalorder %s18, 1
    %p119 = por %p117, %p118
    %p121 = scmp.ne.s32.totalorder %s104, %s120
    %p122 = scmp.eq.s32.totalorder %s18, 0
    %p123 = por %p121, %p122
    %s125 = sadd.s32 %s124, 1
    %p128 = scmp.eq.s32.totalorder %s12, 1
    %p129 = scmp.ne.s32.totalorder %s124, %s126
    %p130 = scmp.eq.s32.totalorder %s12, 0
    %p131 = por %p129, %p130
    %p132 = scmp.ne.s32.totalorder %s124, %s126
    %p133 = scmp.eq.s32.totalorder %s17, 1
    %p134 = por %p132, %p133
    %p135 = scmp.ne.s32.totalorder %s126, %s127
    %p136 = scmp.eq.s32.totalorder %s17, 0
    %p137 = por %p135, %p136
    %p138 = scmp.ne.s32.totalorder %s126, %s127
    %p139 = scmp.eq.s32.totalorder %s18, 1
    %p140 = por %p138, %p139
    %p142 = scmp.ne.s32.totalorder %s127, %s141
    %p143 = scmp.eq.s32.totalorder %s18, 0
    %p144 = por %p142, %p143
    %s146 = sadd.s32 %s145, 1
    %p149 = scmp.eq.s32.totalorder %s12, 1
    %p150 = scmp.ne.s32.totalorder %s145, %s147
    %p151 = scmp.eq.s32.totalorder %s12, 0
    %p152 = por %p150, %p151
    %p153 = scmp.ne.s32.totalorder %s145, %s147
    %p154 = scmp.eq.s32.totalorder %s17, 1
    %p155 = por %p153, %p154
    %p156 = scmp.ne.s32.totalorder %s147, %s148
    %p157 = scmp.eq.s32.totalorder %s17, 0
    %p158 = por %p156, %p157
    %p159 = scmp.ne.s32.totalorder %s147, %s148
    %p160 = scmp.eq.s32.totalorder %s18, 1
    %p161 = por %p159, %p160
    %p163 = scmp.ne.s32.totalorder %s148, %s162
    %p164 = scmp.eq.s32.totalorder %s18, 0
    %p165 = por %p163, %p164
    %s166 = ssub.s32 %s12, %s19
    %p167 = scmp.eq.s32.totalorder %s166, 0
    %s169 = sadd.s32 %s168, 1
    %s170 = scalar_select %p167, %s168, %s169
    %p173 = pneg %p167
    %p174 = scmp.eq.s32.totalorder %s12, 1
    %p175 = por %p173, %p174
    %p176 = scmp.ne.s32.totalorder %s168, %s171
    %p177 = scmp.eq.s32.totalorder %s12, 0
    %p178 = por %p176, %p177
    %p179 = scmp.ne.s32.totalorder %s168, %s171
    %p180 = scmp.eq.s32.totalorder %s17, 1
    %p181 = por %p179, %p180
    %p182 = scmp.ne.s32.totalorder %s171, %s172
    %p183 = scmp.eq.s32.totalorder %s17, 0
    %p184 = por %p182, %p183
    %p185 = scmp.ne.s32.totalorder %s171, %s172
    %p186 = scmp.eq.s32.totalorder %s18, 1
    %p187 = por %p185, %p186
    %p189 = scmp.ne.s32.totalorder %s172, %s188
    %p190 = scmp.eq.s32.totalorder %s18, 0
    %p191 = por %p189, %p190
    %p192 = scmp.le.s32.totalorder 1, %s12
    %p193 = scmp.lt.s32.totalorder %s12, 3
    %p194 = pnand %p192, %p193
    %p195 = pneg %p194
    // Predicated region
    $region9: #{local_model_forward.7} parent=5 // pred_check
      _
    $region10: #{local_model_forward.7} parent=5 // pred_check_branch
      %197 = sbr.rel (%p194) target = $region12
    $region11: #{local_model_forward.7} parent=5 // pred_region
      %s198 = ssub.s32 %s12, 1
      // Predicated region
      $region13: #{local_model_forward.7} parent=11 // pred_check
        %p199 = pneg %p137
      $region14: #{local_model_forward.7} parent=11 // pred_check_branch
        %201 = sbr.rel (%p199) target = $region16
      $region15: #{local_model_forward.7} parent=11 // pred_region
        _
      $region16: #{local_model_forward.7} parent=11 // pred_fallthru
        _
      // Predicated region
      $region17: #{local_model_forward.7} parent=11 // pred_check
        %p202 = pneg %p158
      $region18: #{local_model_forward.7} parent=11 // pred_check_branch
        %204 = sbr.rel (%p202) target = $region20
      $region19: #{local_model_forward.7} parent=11 // pred_region
        _
      $region20: #{local_model_forward.7} parent=11 // pred_fallthru
        _
    $region12: #{local_model_forward.7} parent=5 // pred_fallthru
      _
    %p205 = scmp.lt.s32.totalorder %s12, 2
    // Predicated region
    $region21: #{local_model_forward.7} parent=5 // pred_check
      %p206 = pneg %p205
    $region22: #{local_model_forward.7} parent=5 // pred_check_branch
      %208 = sbr.rel (%p206) target = $region24
    $region23: #{local_model_forward.7} parent=5 // pred_region
      // Predicated region
      $region25: #{local_model_forward.7} parent=23 // pred_check
        %p209 = pneg %p32
      $region26: #{local_model_forward.7} parent=23 // pred_check_branch
        %211 = sbr.rel (%p209) target = $region28
      $region27: #{local_model_forward.7} parent=23 // pred_region
        %p212 = scmp.lt.s32.totalorder %s12, 1
        %s213 = scalar_select %p212, %s12, 1
        %s214 = smul.addr %s213, 8
        %s215 = smul.addr %s214, 4
        %s216 = scalar_lea.vmem %s0, %s215
      $region28: #{local_model_forward.7} parent=23 // pred_fallthru
        _
      // Predicated region
      $region29: #{local_model_forward.7} parent=23 // pred_check
        %p217 = pneg %p58
      $region30: #{local_model_forward.7} parent=23 // pred_check_branch
        %219 = sbr.rel (%p217) target = $region32
      $region31: #{local_model_forward.7} parent=23 // pred_region
        %p220 = scmp.lt.s32.totalorder %s12, 1
        %s221 = scalar_select %p220, %s12, 1
        %s222 = smul.addr %s221, 8
        %s223 = smul.addr %s222, 4
        %s224 = scalar_lea.vmem %s1, %s223
      $region32: #{local_model_forward.7} parent=23 // pred_fallthru
        _
      // Predicated region
      $region33: #{local_model_forward.7} parent=23 // pred_check
        %p225 = pneg %p84
      $region34: #{local_model_forward.7} parent=23 // pred_check_branch
        %227 = sbr.rel (%p225) target = $region36
      $region35: #{local_model_forward.7} parent=23 // pred_region
        %p228 = scmp.lt.s32.totalorder %s12, 1
        %s229 = scalar_select %p228, %s12, 1
        %s230 = smul.addr %s229, 8
        %s231 = smul.addr %s230, 4
        %s232 = scalar_lea.vmem %s2, %s231
      $region36: #{local_model_forward.7} parent=23 // pred_fallthru
        _
      // Predicated region
      $region37: #{local_model_forward.7} parent=23 // pred_check
        %p233 = pneg %p110
      $region38: #{local_model_forward.7} parent=23 // pred_check_branch
        %235 = sbr.rel (%p233) target = $region40
      $region39: #{local_model_forward.7} parent=23 // pred_region
        %p236 = scmp.lt.s32.totalorder %s12, 1
        %s237 = scalar_select %p236, %s12, 1
        %s238 = smul.addr %s237, 2
        %s239 = smul.addr %s238, 8
        %s240 = scalar_lea.vmem %s3, %s239
      $region40: #{local_model_forward.7} parent=23 // pred_fallthru
        _
    $region24: #{local_model_forward.7} parent=5 // pred_fallthru
      _
    %p241 = scmp.le.s32.totalorder 1, %s12
    %p242 = scmp.lt.s32.totalorder %s12, 3
    %p243 = pnand %p241, %p242
    %p244 = pneg %p243
    // Predicated region
    $region41: #{local_model_forward.7} parent=5 // pred_check
      _
    $region42: #{local_model_forward.7} parent=5 // pred_check_branch
      %246 = sbr.rel (%p243) target = $region44
    $region43: #{local_model_forward.7} parent=5 // pred_region
      %s247 = ssub.s32 %s12, 1
      %p248 = scmp.lt.s32.totalorder %s17, 1
      %s249 = scalar_select %p248, %s17, 1
      %s250 = smul.addr %s249, 8
      %s251 = smul.addr %s250, 4
      %s252 = scalar_lea.vmem %s0, %s251
      %p253 = pneg %p38
      %p254 = pneg %p35
      %p255 = scmp.lt.s32.totalorder %s17, 1
      %s256 = scalar_select %p255, %s17, 1
      %s257 = smul.addr %s256, 8
      %s258 = smul.addr %s257, 4
      %s259 = scalar_lea.vmem %s1, %s258
      %p260 = pneg %p64
      %p261 = pneg %p61
      %p262 = scmp.lt.s32.totalorder %s17, 1
      %s263 = scalar_select %p262, %s17, 1
      %s264 = smul.addr %s263, 8
      %s265 = smul.addr %s264, 4
      %s266 = scalar_lea.vmem %s2, %s265
      %p267 = pneg %p90
      %p268 = pneg %p87
      %p269 = scmp.lt.s32.totalorder %s17, 1
      %s270 = scalar_select %p269, %s17, 1
      %s271 = smul.addr %s270, 2
      %s272 = smul.addr %s271, 8
      %s273 = scalar_lea.vmem %s3, %s272
      %p274 = pneg %p116
      %p275 = pneg %p113
      %p276 = pneg %p137
      %p277 = pneg %p134
      %p278 = pneg %p158
      %p279 = pneg %p155
      %p280 = pneg %p184
      %p281 = pneg %p181
      %p282 = scmp.lt.s32.totalorder %s17, 1
      %s283 = scalar_select %p282, %s17, 1
      %s284 = smul.addr %s283, 2
      %s285 = smul.addr %s284, 8
      %s286 = scalar_lea.vmem %s6, %s285
      %p287 = scmp.lt.s32.totalorder %s17, 1
      %s288 = scalar_select %p287, %s17, 1
      %s289 = smul.addr %s288, 8
      %s290 = smul.addr %s289, 4
      %s291 = scalar_lea.vmem %s0, %s290
      %p292 = scmp.lt.s32.totalorder %s17, 1
      %s293 = scalar_select %p292, %s17, 1
      %s294 = smul.addr %s293, 8
      %s295 = smul.addr %s294, 4
      %s296 = scalar_lea.vmem %s1, %s295
      %p297 = scmp.lt.s32.totalorder %s17, 1
      %s298 = scalar_select %p297, %s17, 1
      %s299 = smul.addr %s298, 8
      %s300 = smul.addr %s299, 4
      %s301 = scalar_lea.vmem %s2, %s300
      %p302 = scmp.lt.s32.totalorder %s17, 1
      %s303 = scalar_select %p302, %s17, 1
      %s304 = smul.addr %s303, 2
      %s305 = smul.addr %s304, 8
      %s306 = scalar_lea.vmem %s3, %s305
      %p307 = scmp.lt.s32.totalorder %s17, 1
      %s308 = scalar_select %p307, %s17, 1
      %s309 = smul.addr %s308, 2
      %s310 = smul.addr %s309, 8
      %s311 = scalar_lea.vmem %s6, %s310
      %v314 = vld [vmem:[%s291] sm:$0xf]
      %v315 = vld [vmem:[%s291 + $0x4] sm:$0xf]
      %v316 = vld [vmem:[%s291 + $0x8] sm:$0xf]
      %v317 = vld [vmem:[%s291 + $0xc] sm:$0xf]
      %v318 = vld [vmem:[%s291 + $0x10] sm:$0xf]
      %v319 = vld [vmem:[%s291 + $0x14] sm:$0xf]
      %v320 = vld [vmem:[%s291 + $0x18] sm:$0xf]
      %v321 = vld [vmem:[%s291 + $0x1c] sm:$0xf]
      %v322 = vmul.bf16 %v314, 1052065461
      %v323 = vmul.bf16 %v315, 1052065461
      %v324 = vmul.bf16 %v316, 1052065461
      %v325 = vmul.bf16 %v317, 1052065461
      %v326 = vmul.bf16 %v318, 1052065461
      %v327 = vmul.bf16 %v319, 1052065461
      %v328 = vmul.bf16 %v320, 1052065461
      %v329 = vmul.bf16 %v321, 1052065461
      %v330 = vld [vmem:[%s296] sm:$0xf]
      %v331 = vld [vmem:[%s296 + $0x4] sm:$0xf]
      %v332 = vld [vmem:[%s296 + $0x8] sm:$0xf]
      %v333 = vld [vmem:[%s296 + $0xc] sm:$0xf]
      %v334 = vld [vmem:[%s296 + $0x10] sm:$0xf]
      %v335 = vld [vmem:[%s296 + $0x14] sm:$0xf]
      %v336 = vld [vmem:[%s296 + $0x18] sm:$0xf]
      %v337 = vld [vmem:[%s296 + $0x1c] sm:$0xf]
      %v338 = vld [vmem:[%s301] sm:$0xf]
      %v339 = vld [vmem:[%s301 + $0x4] sm:$0xf]
      %v340 = vld [vmem:[%s301 + $0x8] sm:$0xf]
      %v341 = vld [vmem:[%s301 + $0xc] sm:$0xf]
      %v342 = vld [vmem:[%s301 + $0x10] sm:$0xf]
      %v343 = vld [vmem:[%s301 + $0x14] sm:$0xf]
      %v344 = vld [vmem:[%s301 + $0x18] sm:$0xf]
      %v345 = vld [vmem:[%s301 + $0x1c] sm:$0xf]
      %v354 = vunpack.c.l.b16 %v330
      %v355 = vunpack.c.l.b16 %v331
      %v356 = vunpack.c.l.b16 %v332
      %v357 = vunpack.c.l.b16 %v333
      %v358 = vunpack.c.l.b16 %v334
      %v359 = vunpack.c.l.b16 %v335
      %v360 = vunpack.c.l.b16 %v336
      %v361 = vunpack.c.l.b16 %v337
      %v362 = vpack.c.b16 %v355, %v354
      %v363 = vpack.c.b16 %v357, %v356
      %v364 = vpack.c.b16 %v359, %v358
      %v365 = vpack.c.b16 %v361, %v360
      %v366 = vrot.slane %v362, 7
      %v367 = vrot.slane %v363, 7
      %v368 = vrot.slane %v364, 7
      %v369 = vrot.slane %v365, 7
      %vm370 = vcmask 1040384
      %v373 = vsel %vm370, 0, %v366
      %v375 = vsel %vm370, 0, %v367
      %v377 = vsel %vm370, 0, %v368
      %v379 = vsel %vm370, 0, %v369
      %v380 = vsel %vm370, %v366, 0
      %v381 = vsel %vm370, %v367, 0
      %v382 = vsel %vm370, %v368, 0
      %v383 = vsel %vm370, %v369, 0
      %v386 = vunpack.c.l.b16 %v322
      %v387 = vunpack.c.l.b16 %v323
      %v388 = vpack.c.b16 %v387, %v386
      %vm389 = vcmask 64512
      %v391 = vsel %vm389, %v388, 0
      %v393 = vsel %vm389, %v373, 0
      %v395 = vsel %vm389, %v380, 0
      %397 = vmatprep.subr.bf16.mxu0 0
      %398 = vmatpush1.bf16.xpose.msra.mxu0 0
      %399 = vmatprep.subr.bf16.mxu0 0
      %400 = vmatpush1.bf16.xpose.msra.mxu0 0
      %401 = vmatprep.subr.bf16.mxu0 0
      %402 = vmatpush1.bf16.xpose.msra.mxu0 0
      %403 = vmatprep.subr.bf16.mxu0 0
      %404 = vmatpush1.bf16.xpose.msra.mxu0 0
      %405 = vmatprep.subr.bf16.mxu0 0
      %406 = vmatpush1.bf16.xpose.msra.mxu0 0
      %407 = vmatprep.subr.bf16.mxu0 0
      %408 = vmatpush1.bf16.xpose.msra.mxu0 0
      %409 = vmatprep.subr.bf16.mxu0 0
      %410 = vmatpush1.bf16.xpose.msra.mxu0 %v395
      %411 = vmatprep.subr.bf16.mxu0 0
      %412 = vmatpush1.bf16.xpose.msra.mxu0 %v393
      %413 = vmatprep.subr.bf16.mxu0 0
      %414 = vmatpush2.bf16.xpose.msra.mxu0 0
      %415 = vmatprep.subr.bf16.mxu0 0
      %416 = vmatpush2.bf16.xpose.msra.mxu0 0
      %417 = vmatprep.subr.bf16.mxu0 0
      %418 = vmatpush2.bf16.xpose.msra.mxu0 0
      %419 = vmatprep.subr.bf16.mxu0 0
      %420 = vmatpush2.bf16.xpose.msra.mxu0 0
      %421 = vmatprep.subr.bf16.mxu0 0
      %422 = vmatpush2.bf16.xpose.msra.mxu0 0
      %423 = vmatprep.subr.bf16.mxu0 0
      %424 = vmatpush2.bf16.xpose.msra.mxu0 0
      %425 = vmatprep.subr.bf16.mxu0 0
      %426 = vmatpush2.bf16.xpose.msra.mxu0 0
      %427 = vmatprep.subr.bf16.mxu0 0
      %428 = vmatpush2.bf16.xpose.msra.mxu0 0
      %429 = vmatprep.mubr.bf16.mxu0 0
      %430 = vmatmul.mubr.bf16.gmra.mxu0 %v391
      %v431 = vpop.f32.mrf.mxu0
      %v432 = vadd.f32 0.0, %v431
      %v433 = vpop.f32.mrf.mxu0
      %v434 = vpop.f32.mrf.mxu0
      %v435 = vadd.f32 0.0, %v434
      %v436 = vpop.f32.mrf.mxu0
      %437 = vdwg.mxu0
      %v440 = vunpack.c.l.b16 %v324
      %v441 = vunpack.c.l.b16 %v325
      %v442 = vpack.c.b16 %v441, %v440
      %v444 = vsel %vm389, %v442, 0
      %v446 = vsel %vm389, %v375, 0
      %v448 = vsel %vm389, %v381, 0
      %450 = vmatprep.subr.bf16.mxu0 0
      %451 = vmatpush1.bf16.xpose.msra.mxu0 0
      %452 = vmatprep.subr.bf16.mxu0 0
      %453 = vmatpush1.bf16.xpose.msra.mxu0 0
      %454 = vmatprep.subr.bf16.mxu0 0
      %455 = vmatpush1.bf16.xpose.msra.mxu0 0
      %456 = vmatprep.subr.bf16.mxu0 0
      %457 = vmatpush1.bf16.xpose.msra.mxu0 0
      %458 = vmatprep.subr.bf16.mxu0 0
      %459 = vmatpush1.bf16.xpose.msra.mxu0 0
      %460 = vmatprep.subr.bf16.mxu0 0
      %461 = vmatpush1.bf16.xpose.msra.mxu0 0
      %462 = vmatprep.subr.bf16.mxu0 0
      %463 = vmatpush1.bf16.xpose.msra.mxu0 %v448
      %464 = vmatprep.subr.bf16.mxu0 0
      %465 = vmatpush1.bf16.xpose.msra.mxu0 %v446
      %466 = vmatprep.subr.bf16.mxu0 0
      %467 = vmatpush2.bf16.xpose.msra.mxu0 0
      %468 = vmatprep.subr.bf16.mxu0 0
      %469 = vmatpush2.bf16.xpose.msra.mxu0 0
      %470 = vmatprep.subr.bf16.mxu0 0
      %471 = vmatpush2.bf16.xpose.msra.mxu0 0
      %472 = vmatprep.subr.bf16.mxu0 0
      %473 = vmatpush2.bf16.xpose.msra.mxu0 0
      %474 = vmatprep.subr.bf16.mxu0 0
      %475 = vmatpush2.bf16.xpose.msra.mxu0 0
      %476 = vmatprep.subr.bf16.mxu0 0
      %477 = vmatpush2.bf16.xpose.msra.mxu0 0
      %478 = vmatprep.subr.bf16.mxu0 0
      %479 = vmatpush2.bf16.xpose.msra.mxu0 0
      %480 = vmatprep.subr.bf16.mxu0 0
      %481 = vmatpush2.bf16.xpose.msra.mxu0 0
      %482 = vmatprep.mubr.bf16.mxu0 0
      %483 = vmatmul.mubr.bf16.gmra.mxu0 %v444
      %v484 = vpop.f32.mrf.mxu0
      %v485 = vadd.f32 0.0, %v484
      %v486 = vpop.f32.mrf.mxu0
      %v487 = vpop.f32.mrf.mxu0
      %v488 = vadd.f32 0.0, %v487
      %v489 = vpop.f32.mrf.mxu0
      %490 = vdwg.mxu0
      %v493 = vunpack.c.l.b16 %v326
      %v494 = vunpack.c.l.b16 %v327
      %v495 = vpack.c.b16 %v494, %v493
      %v497 = vsel %vm389, %v495, 0
      %v499 = vsel %vm389, %v377, 0
      %v501 = vsel %vm389, %v382, 0
      %503 = vmatprep.subr.bf16.mxu0 0
      %504 = vmatpush1.bf16.xpose.msra.mxu0 0
      %505 = vmatprep.subr.bf16.mxu0 0
      %506 = vmatpush1.bf16.xpose.msra.mxu0 0
      %507 = vmatprep.subr.bf16.mxu0 0
      %508 = vmatpush1.bf16.xpose.msra.mxu0 0
      %509 = vmatprep.subr.bf16.mxu0 0
      %510 = vmatpush1.bf16.xpose.msra.mxu0 0
      %511 = vmatprep.subr.bf16.mxu0 0
      %512 = vmatpush1.bf16.xpose.msra.mxu0 0
      %513 = vmatprep.subr.bf16.mxu0 0
      %514 = vmatpush1.bf16.xpose.msra.mxu0 0
      %515 = vmatprep.subr.bf16.mxu0 0
      %516 = vmatpush1.bf16.xpose.msra.mxu0 %v501
      %517 = vmatprep.subr.bf16.mxu0 0
      %518 = vmatpush1.bf16.xpose.msra.mxu0 %v499
      %519 = vmatprep.subr.bf16.mxu0 0
      %520 = vmatpush2.bf16.xpose.msra.mxu0 0
      %521 = vmatprep.subr.bf16.mxu0 0
      %522 = vmatpush2.bf16.xpose.msra.mxu0 0
      %523 = vmatprep.subr.bf16.mxu0 0
      %524 = vmatpush2.bf16.xpose.msra.mxu0 0
      %525 = vmatprep.subr.bf16.mxu0 0
      %526 = vmatpush2.bf16.xpose.msra.mxu0 0
      %527 = vmatprep.subr.bf16.mxu0 0
      %528 = vmatpush2.bf16.xpose.msra.mxu0 0
      %529 = vmatprep.subr.bf16.mxu0 0
      %530 = vmatpush2.bf16.xpose.msra.mxu0 0
      %531 = vmatprep.subr.bf16.mxu0 0
      %532 = vmatpush2.bf16.xpose.msra.mxu0 0
      %533 = vmatprep.subr.bf16.mxu0 0
      %534 = vmatpush2.bf16.xpose.msra.mxu0 0
      %535 = vmatprep.mubr.bf16.mxu0 0
      %536 = vmatmul.mubr.bf16.gmra.mxu0 %v497
      %v537 = vpop.f32.mrf.mxu0
      %v538 = vadd.f32 0.0, %v537
      %v539 = vpop.f32.mrf.mxu0
      %v540 = vpop.f32.mrf.mxu0
      %v541 = vadd.f32 0.0, %v540
      %v542 = vpop.f32.mrf.mxu0
      %543 = vdwg.mxu0
      %v546 = vunpack.c.l.b16 %v328
      %v547 = vunpack.c.l.b16 %v329
      %v548 = vpack.c.b16 %v547, %v546
      %v550 = vsel %vm389, %v548, 0
      %v552 = vsel %vm389, %v379, 0
      %v554 = vsel %vm389, %v383, 0
      %556 = vmatprep.subr.bf16.mxu0 0
      %557 = vmatpush1.bf16.xpose.msra.mxu0 0
      %558 = vmatprep.subr.bf16.mxu0 0
      %559 = vmatpush1.bf16.xpose.msra.mxu0 0
      %560 = vmatprep.subr.bf16.mxu0 0
      %561 = vmatpush1.bf16.xpose.msra.mxu0 0
      %562 = vmatprep.subr.bf16.mxu0 0
      %563 = vmatpush1.bf16.xpose.msra.mxu0 0
      %564 = vmatprep.subr.bf16.mxu0 0
      %565 = vmatpush1.bf16.xpose.msra.mxu0 0
      %566 = vmatprep.subr.bf16.mxu0 0
      %567 = vmatpush1.bf16.xpose.msra.mxu0 0
      %568 = vmatprep.subr.bf16.mxu0 0
      %569 = vmatpush1.bf16.xpose.msra.mxu0 %v554
      %570 = vmatprep.subr.bf16.mxu0 0
      %571 = vmatpush1.bf16.xpose.msra.mxu0 %v552
      %572 = vmatprep.subr.bf16.mxu0 0
      %573 = vmatpush2.bf16.xpose.msra.mxu0 0
      %574 = vmatprep.subr.bf16.mxu0 0
      %575 = vmatpush2.bf16.xpose.msra.mxu0 0
      %576 = vmatprep.subr.bf16.mxu0 0
      %577 = vmatpush2.bf16.xpose.msra.mxu0 0
      %578 = vmatprep.subr.bf16.mxu0 0
      %579 = vmatpush2.bf16.xpose.msra.mxu0 0
      %580 = vmatprep.subr.bf16.mxu0 0
      %581 = vmatpush2.bf16.xpose.msra.mxu0 0
      %582 = vmatprep.subr.bf16.mxu0 0
      %583 = vmatpush2.bf16.xpose.msra.mxu0 0
      %584 = vmatprep.subr.bf16.mxu0 0
      %585 = vmatpush2.bf16.xpose.msra.mxu0 0
      %586 = vmatprep.subr.bf16.mxu0 0
      %587 = vmatpush2.bf16.xpose.msra.mxu0 0
      %588 = vmatprep.mubr.bf16.mxu0 0
      %589 = vmatmul.mubr.bf16.gmra.mxu0 %v550
      %v590 = vpop.f32.mrf.mxu0
      %v591 = vadd.f32 0.0, %v590
      %v592 = vpop.f32.mrf.mxu0
      %v593 = vpop.f32.mrf.mxu0
      %v594 = vadd.f32 0.0, %v593
      %v595 = vpop.f32.mrf.mxu0
      %596 = vdwg.mxu0
      %v597 = vlaneseq
      %v598 = vshrl.u32 %v597, 7
      %v599 = vadd.s32 %v598, 8
      %v600 = vlaneseq
      %v601 = vand.u32 %v600, 127
      %vm602 = vcmp.ge.s32.totalorder %v601, %v598
      %vm603 = vcmp.ge.s32.totalorder %v601, %v599
      %v604 = vadd.s32 %v598, 4
      %v605 = vadd.s32 %v599, 4
      %vm606 = vcmp.le.s32.totalorder %v601, %v604
      %vm607 = vcmp.le.s32.totalorder %v601, %v605
      %vm608 = vmand %vm602, %vm606
      %vm609 = vmand %vm603, %vm607
      %v610 = vsel %vm608, 1, 0
      %v611 = vsel %vm609, 1, 0
      %vm612 = vcmp.eq.s32.totalorder %v610, 1
      %vm613 = vcmp.eq.s32.totalorder %v611, 1
      %v614 = vsel %vm612, %v432, -1e+30
      %v615 = vsel %vm613, %v435, -1e+30
      %v616 = vsel %vm612, %v485, -1e+30
      %v617 = vsel %vm613, %v488, -1e+30
      %v618 = vsel %vm612, %v538, -1e+30
      %v619 = vsel %vm613, %v541, -1e+30
      %v620 = vsel %vm612, %v591, -1e+30
      %v621 = vsel %vm613, %v594, -1e+30
      %vm622 = vcmask 162816
      %v623 = vsel %vm622, %v614, -inf
      %624 = vmax.xlane.f32.xlu0 %v623
      %v625 = vpop.xlane.xlu0 %624
      %v626 = vsel %vm622, %v615, -inf
      %627 = vmax.xlane.f32.xlu0 %v626
      %v628 = vpop.xlane.xlu0 %627
      %v629 = vsel %vm622, %v616, -inf
      %630 = vmax.xlane.f32.xlu0 %v629
      %v631 = vpop.xlane.xlu0 %630
      %v632 = vsel %vm622, %v617, -inf
      %633 = vmax.xlane.f32.xlu0 %v632
      %v634 = vpop.xlane.xlu0 %633
      %v635 = vsel %vm622, %v618, -inf
      %636 = vmax.xlane.f32.xlu0 %v635
      %v637 = vpop.xlane.xlu0 %636
      %v638 = vsel %vm622, %v619, -inf
      %639 = vmax.xlane.f32.xlu0 %v638
      %v640 = vpop.xlane.xlu0 %639
      %v641 = vsel %vm622, %v620, -inf
      %642 = vmax.xlane.f32.xlu0 %v641
      %v643 = vpop.xlane.xlu0 %642
      %v644 = vsel %vm622, %v621, -inf
      %645 = vmax.xlane.f32.xlu0 %v644
      %v646 = vpop.xlane.xlu0 %645
      %v647 = vsub.f32 %v614, %v625
      %v648 = vsub.f32 %v615, %v628
      %v649 = vsub.f32 %v616, %v631
      %v650 = vsub.f32 %v617, %v634
      %v651 = vsub.f32 %v618, %v637
      %v652 = vsub.f32 %v619, %v640
      %v653 = vsub.f32 %v620, %v643
      %v654 = vsub.f32 %v621, %v646
      %v655 = vmul.f32 %v647, 1.442695
      %v656 = vpow.pop %v655
      %v657 = vmul.f32 %v648, 1.442695
      %v658 = vpow.pop %v657
      %v659 = vmul.f32 %v649, 1.442695
      %v660 = vpow.pop %v659
      %v661 = vmul.f32 %v650, 1.442695
      %v662 = vpow.pop %v661
      %v663 = vmul.f32 %v651, 1.442695
      %v664 = vpow.pop %v663
      %v665 = vmul.f32 %v652, 1.442695
      %v666 = vpow.pop %v665
      %v667 = vmul.f32 %v653, 1.442695
      %v668 = vpow.pop %v667
      %v669 = vmul.f32 %v654, 1.442695
      %v670 = vpow.pop %v669
      %v671 = vsel %vm622, %v656, 0.0
      %672 = vadd.xlane.f32.xlu0 %v671
      %v673 = vpop.xlane.xlu0 %672
      %v674 = vsel %vm622, %v658, 0.0
      %675 = vadd.xlane.f32.xlu0 %v674
      %v676 = vpop.xlane.xlu0 %675
      %v677 = vsel %vm622, %v660, 0.0
      %678 = vadd.xlane.f32.xlu0 %v677
      %v679 = vpop.xlane.xlu0 %678
      %v680 = vsel %vm622, %v662, 0.0
      %681 = vadd.xlane.f32.xlu0 %v680
      %v682 = vpop.xlane.xlu0 %681
      %v683 = vsel %vm622, %v664, 0.0
      %684 = vadd.xlane.f32.xlu0 %v683
      %v685 = vpop.xlane.xlu0 %684
      %v686 = vsel %vm622, %v666, 0.0
      %687 = vadd.xlane.f32.xlu0 %v686
      %v688 = vpop.xlane.xlu0 %687
      %v689 = vsel %vm622, %v668, 0.0
      %690 = vadd.xlane.f32.xlu0 %v689
      %v691 = vpop.xlane.xlu0 %690
      %v692 = vsel %vm622, %v670, 0.0
      %693 = vadd.xlane.f32.xlu0 %v692
      %v694 = vpop.xlane.xlu0 %693
      %v695 = vrcp.pop %v673
      %v696 = vrcp.pop %v676
      %v697 = vrcp.pop %v679
      %v698 = vrcp.pop %v682
      %v699 = vrcp.pop %v685
      %v700 = vrcp.pop %v688
      %v701 = vrcp.pop %v691
      %v702 = vrcp.pop %v694
      %v703 = vmul.f32 %v656, %v695
      %v704 = vmul.f32 %v658, %v696
      %v705 = vmul.f32 %v660, %v697
      %v706 = vmul.f32 %v662, %v698
      %v707 = vmul.f32 %v664, %v699
      %v708 = vmul.f32 %v666, %v700
      %v709 = vmul.f32 %v668, %v701
      %v710 = vmul.f32 %v670, %v702
      %v711 = vpack.c.bf16 %v704, %v703
      %713 = vrot.lane.b32.xlu0 %v711, 124
      %v714 = vpop.permute.xlu0 %713
      %v717 = vunpack.c.l.b16 %v338
      %v718 = vunpack.c.l.b16 %v339
      %v719 = vpack.c.b16 %v718, %v717
      %vm721 = vcmask 130048
      %v723 = vsel %vm721, %v714, 0
      %725 = vmatprep.subr.bf16.mxu0 0
      %726 = vmatpush1.bf16.msra.mxu0 0
      %727 = vmatprep.subr.bf16.mxu0 0
      %728 = vmatpush1.bf16.msra.mxu0 0
      %729 = vmatprep.subr.bf16.mxu0 0
      %730 = vmatpush1.bf16.msra.mxu0 0
      %731 = vmatprep.subr.bf16.mxu0 0
      %732 = vmatpush1.bf16.msra.mxu0 0
      %733 = vmatprep.subr.bf16.mxu0 0
      %734 = vmatpush1.bf16.msra.mxu0 0
      %735 = vmatprep.subr.bf16.mxu0 0
      %736 = vmatpush1.bf16.msra.mxu0 0
      %737 = vmatprep.subr.bf16.mxu0 0
      %738 = vmatpush1.bf16.msra.mxu0 0
      %739 = vmatprep.subr.bf16.mxu0 0
      %740 = vmatpush1.bf16.msra.mxu0 %v719
      %741 = vmatprep.subr.bf16.mxu0 0
      %742 = vmatpush2.bf16.msra.mxu0 0
      %743 = vmatprep.subr.bf16.mxu0 0
      %744 = vmatpush2.bf16.msra.mxu0 0
      %745 = vmatprep.subr.bf16.mxu0 0
      %746 = vmatpush2.bf16.msra.mxu0 0
      %747 = vmatprep.subr.bf16.mxu0 0
      %748 = vmatpush2.bf16.msra.mxu0 0
      %749 = vmatprep.subr.bf16.mxu0 0
      %750 = vmatpush2.bf16.msra.mxu0 0
      %751 = vmatprep.subr.bf16.mxu0 0
      %752 = vmatpush2.bf16.msra.mxu0 0
      %753 = vmatprep.subr.bf16.mxu0 0
      %754 = vmatpush2.bf16.msra.mxu0 0
      %755 = vmatprep.subr.bf16.mxu0 0
      %756 = vmatpush2.bf16.msra.mxu0 0
      %757 = vmatprep.mubr.bf16.mxu0 0
      %758 = vmatmul.mubr.bf16.gmra.mxu0 %v723
      %v759 = vpop.f32.mrf.mxu0
      %v760 = vadd.f32 0.0, %v759
      %v761 = vpop.f32.mrf.mxu0
      %v762 = vpop.f32.mrf.mxu0
      %v763 = vadd.f32 0.0, %v762
      %v764 = vpop.f32.mrf.mxu0
      %765 = vdwg.mxu0
      %v766 = vpack.c.bf16 %v706, %v705
      %768 = vrot.lane.b32.xlu0 %v766, 124
      %v769 = vpop.permute.xlu0 %768
      %v772 = vunpack.c.l.b16 %v340
      %v773 = vunpack.c.l.b16 %v341
      %v774 = vpack.c.b16 %v773, %v772
      %v777 = vsel %vm721, %v769, 0
      %779 = vmatprep.subr.bf16.mxu0 0
      %780 = vmatpush1.bf16.msra.mxu0 0
      %781 = vmatprep.subr.bf16.mxu0 0
      %782 = vmatpush1.bf16.msra.mxu0 0
      %783 = vmatprep.subr.bf16.mxu0 0
      %784 = vmatpush1.bf16.msra.mxu0 0
      %785 = vmatprep.subr.bf16.mxu0 0
      %786 = vmatpush1.bf16.msra.mxu0 0
      %787 = vmatprep.subr.bf16.mxu0 0
      %788 = vmatpush1.bf16.msra.mxu0 0
      %789 = vmatprep.subr.bf16.mxu0 0
      %790 = vmatpush1.bf16.msra.mxu0 0
      %791 = vmatprep.subr.bf16.mxu0 0
      %792 = vmatpush1.bf16.msra.mxu0 0
      %793 = vmatprep.subr.bf16.mxu0 0
      %794 = vmatpush1.bf16.msra.mxu0 %v774
      %795 = vmatprep.subr.bf16.mxu0 0
      %796 = vmatpush2.bf16.msra.mxu0 0
      %797 = vmatprep.subr.bf16.mxu0 0
      %798 = vmatpush2.bf16.msra.mxu0 0
      %799 = vmatprep.subr.bf16.mxu0 0
      %800 = vmatpush2.bf16.msra.mxu0 0
      %801 = vmatprep.subr.bf16.mxu0 0
      %802 = vmatpush2.bf16.msra.mxu0 0
      %803 = vmatprep.subr.bf16.mxu0 0
      %804 = vmatpush2.bf16.msra.mxu0 0
      %805 = vmatprep.subr.bf16.mxu0 0
      %806 = vmatpush2.bf16.msra.mxu0 0
      %807 = vmatprep.subr.bf16.mxu0 0
      %808 = vmatpush2.bf16.msra.mxu0 0
      %809 = vmatprep.subr.bf16.mxu0 0
      %810 = vmatpush2.bf16.msra.mxu0 0
      %811 = vmatprep.mubr.bf16.mxu0 0
      %812 = vmatmul.mubr.bf16.gmra.mxu0 %v777
      %v813 = vpop.f32.mrf.mxu0
      %v814 = vadd.f32 0.0, %v813
      %v815 = vpop.f32.mrf.mxu0
      %v816 = vpop.f32.mrf.mxu0
      %v817 = vadd.f32 0.0, %v816
      %v818 = vpop.f32.mrf.mxu0
      %819 = vdwg.mxu0
      %v820 = vpack.c.bf16 %v708, %v707
      %822 = vrot.lane.b32.xlu0 %v820, 124
      %v823 = vpop.permute.xlu0 %822
      %v826 = vunpack.c.l.b16 %v342
      %v827 = vunpack.c.l.b16 %v343
      %v828 = vpack.c.b16 %v827, %v826
      %v831 = vsel %vm721, %v823, 0
      %833 = vmatprep.subr.bf16.mxu0 0
      %834 = vmatpush1.bf16.msra.mxu0 0
      %835 = vmatprep.subr.bf16.mxu0 0
      %836 = vmatpush1.bf16.msra.mxu0 0
      %837 = vmatprep.subr.bf16.mxu0 0
      %838 = vmatpush1.bf16.msra.mxu0 0
      %839 = vmatprep.subr.bf16.mxu0 0
      %840 = vmatpush1.bf16.msra.mxu0 0
      %841 = vmatprep.subr.bf16.mxu0 0
      %842 = vmatpush1.bf16.msra.mxu0 0
      %843 = vmatprep.subr.bf16.mxu0 0
      %844 = vmatpush1.bf16.msra.mxu0 0
      %845 = vmatprep.subr.bf16.mxu0 0
      %846 = vmatpush1.bf16.msra.mxu0 0
      %847 = vmatprep.subr.bf16.mxu0 0
      %848 = vmatpush1.bf16.msra.mxu0 %v828
      %849 = vmatprep.subr.bf16.mxu0 0
      %850 = vmatpush2.bf16.msra.mxu0 0
      %851 = vmatprep.subr.bf16.mxu0 0
      %852 = vmatpush2.bf16.msra.mxu0 0
      %853 = vmatprep.subr.bf16.mxu0 0
      %854 = vmatpush2.bf16.msra.mxu0 0
      %855 = vmatprep.subr.bf16.mxu0 0
      %856 = vmatpush2.bf16.msra.mxu0 0
      %857 = vmatprep.subr.bf16.mxu0 0
      %858 = vmatpush2.bf16.msra.mxu0 0
      %859 = vmatprep.subr.bf16.mxu0 0
      %860 = vmatpush2.bf16.msra.mxu0 0
      %861 = vmatprep.subr.bf16.mxu0 0
      %862 = vmatpush2.bf16.msra.mxu0 0
      %863 = vmatprep.subr.bf16.mxu0 0
      %864 = vmatpush2.bf16.msra.mxu0 0
      %865 = vmatprep.mubr.bf16.mxu0 0
      %866 = vmatmul.mubr.bf16.gmra.mxu0 %v831
      %v867 = vpop.f32.mrf.mxu0
      %v868 = vadd.f32 0.0, %v867
      %v869 = vpop.f32.mrf.mxu0
      %v870 = vpop.f32.mrf.mxu0
      %v871 = vadd.f32 0.0, %v870
      %v872 = vpop.f32.mrf.mxu0
      %873 = vdwg.mxu0
      %v874 = vpack.c.bf16 %v710, %v709
      %876 = vrot.lane.b32.xlu0 %v874, 124
      %v877 = vpop.permute.xlu0 %876
      %v880 = vunpack.c.l.b16 %v344
      %v881 = vunpack.c.l.b16 %v345
      %v882 = vpack.c.b16 %v881, %v880
      %v885 = vsel %vm721, %v877, 0
      %887 = vmatprep.subr.bf16.mxu0 0
      %888 = vmatpush1.bf16.msra.mxu0 0
      %889 = vmatprep.subr.bf16.mxu0 0
      %890 = vmatpush1.bf16.msra.mxu0 0
      %891 = vmatprep.subr.bf16.mxu0 0
      %892 = vmatpush1.bf16.msra.mxu0 0
      %893 = vmatprep.subr.bf16.mxu0 0
      %894 = vmatpush1.bf16.msra.mxu0 0
      %895 = vmatprep.subr.bf16.mxu0 0
      %896 = vmatpush1.bf16.msra.mxu0 0
      %897 = vmatprep.subr.bf16.mxu0 0
      %898 = vmatpush1.bf16.msra.mxu0 0
      %899 = vmatprep.subr.bf16.mxu0 0
      %900 = vmatpush1.bf16.msra.mxu0 0
      %901 = vmatprep.subr.bf16.mxu0 0
      %902 = vmatpush1.bf16.msra.mxu0 %v882
      %903 = vmatprep.subr.bf16.mxu0 0
      %904 = vmatpush2.bf16.msra.mxu0 0
      %905 = vmatprep.subr.bf16.mxu0 0
      %906 = vmatpush2.bf16.msra.mxu0 0
      %907 = vmatprep.subr.bf16.mxu0 0
      %908 = vmatpush2.bf16.msra.mxu0 0
      %909 = vmatprep.subr.bf16.mxu0 0
      %910 = vmatpush2.bf16.msra.mxu0 0
      %911 = vmatprep.subr.bf16.mxu0 0
      %912 = vmatpush2.bf16.msra.mxu0 0
      %913 = vmatprep.subr.bf16.mxu0 0
      %914 = vmatpush2.bf16.msra.mxu0 0
      %915 = vmatprep.subr.bf16.mxu0 0
      %916 = vmatpush2.bf16.msra.mxu0 0
      %917 = vmatprep.subr.bf16.mxu0 0
      %918 = vmatpush2.bf16.msra.mxu0 0
      %919 = vmatprep.mubr.bf16.mxu0 0
      %920 = vmatmul.mubr.bf16.gmra.mxu0 %v885
      %v921 = vpop.f32.mrf.mxu0
      %v922 = vadd.f32 0.0, %v921
      %v923 = vpop.f32.mrf.mxu0
      %v924 = vpop.f32.mrf.mxu0
      %v925 = vadd.f32 0.0, %v924
      %v926 = vpop.f32.mrf.mxu0
      %927 = vdwg.mxu0
      %930 = vrot.lane.b32.xlu0 %v814, 8
      %v931 = vpop.permute.xlu0 %930
      %932 = vrot.lane.b32.xlu0 %v817, 8
      %v933 = vpop.permute.xlu0 %932
      %938 = vrot.lane.b32.xlu0 %v868, 16
      %v939 = vpop.permute.xlu0 %938
      %940 = vrot.lane.b32.xlu0 %v871, 16
      %v941 = vpop.permute.xlu0 %940
      %946 = vrot.lane.b32.xlu0 %v922, 24
      %v947 = vpop.permute.xlu0 %946
      %948 = vrot.lane.b32.xlu0 %v925, 24
      %v949 = vpop.permute.xlu0 %948
      %v952 = vsel %vm389, %v760, %v931
      %v953 = vsel %vm389, %v763, %v933
      %v954 = vsel %vm721, %v952, %v939
      %v955 = vsel %vm721, %v953, %v941
      %vm956 = vcmask 195584
      %v957 = vsel %vm956, %v954, %v947
      %v958 = vsel %vm956, %v955, %v949
      %vm959 = vcmask 261120
      %v960 = vsel %vm959, %v957, 0.0
      %961 = vadd.xlane.f32.xlu0 %v960
      %v962 = vpop.xlane.xlu0 %961
      %v963 = vsel %vm959, %v958, 0.0
      %964 = vadd.xlane.f32.xlu0 %v963
      %v965 = vpop.xlane.xlu0 %964
      %v966 = vrcp.pop 32.0
      %v967 = vmul.f32 %v962, %v966
      %v968 = vmul.f32 %v965, %v966
      %v969 = vsub.f32 %v957, %v967
      %v970 = vsub.f32 %v958, %v968
      %v971 = vmul.f32 %v969, %v969
      %v972 = vmul.f32 %v970, %v970
      %v973 = vsel %vm959, %v971, 0.0
      %974 = vadd.xlane.f32.xlu0 %v973
      %v975 = vpop.xlane.xlu0 %974
      %v976 = vsel %vm959, %v972, 0.0
      %977 = vadd.xlane.f32.xlu0 %v976
      %v978 = vpop.xlane.xlu0 %977
      %v979 = vmul.f32 %v975, %v966
      %v980 = vmul.f32 %v978, %v966
      %v981 = vadd.f32 %v979, 1e-05
      %v982 = vadd.f32 %v980, 1e-05
      %v983 = vrsqrt.pop %v981
      %v984 = vrsqrt.pop %v982
      %v985 = vmul.f32 %v969, %v983
      %v986 = vmul.f32 %v970, %v984
      %v987 = vld [vmem:[%s4] sm:$0x1]
      %v989 = vlaneseq
      %v990 = vshrl.u32 %v989, 7
      %v991 = vsub.s32 0, %v990
      %v992 = vrot.slane %v987, %v991
      %v994 = vmul.f32 %v985, %v992
      %v995 = vmul.f32 %v986, %v992
      %v996 = vld [vmem:[%s5] sm:$0x1]
      %v998 = vlaneseq
      %v999 = vshrl.u32 %v998, 7
      %v1000 = vsub.s32 0, %v999
      %v1001 = vrot.slane %v996, %v1000
      %v1003 = vadd.f32 %v994, %v1001
      %v1004 = vadd.f32 %v995, %v1001
      %v1005 = vld [vmem:[%s306] sm:$0xff]
      %v1006 = vld [vmem:[%s306 + $0x8] sm:$0xff]
      %v1007 = vadd.f32 %v1003, %v1005
      %v1008 = vadd.f32 %v1004, %v1006
      %1009 = vst.msk [vmem:[%s311] sm:$0xff] %vm959, %v1007
      %1010 = vst.msk [vmem:[%s311 + $0x8] sm:$0xff] %vm959, %v1008
      %p1011 = scmp.lt.s32.totalorder %s17, 1
      %s1012 = scalar_select %p1011, %s17, 1
      %s1013 = smul.addr %s1012, 2
      %s1014 = smul.addr %s1013, 8
      %s1015 = scalar_lea.vmem %s6, %s1014
      // Predicated region
      $region45: #{local_model_forward.7} parent=43 // pred_check
        %p1016 = pneg %p181
      $region46: #{local_model_forward.7} parent=43 // pred_check_branch
        %1018 = sbr.rel (%p1016) target = $region48
      $region47: #{local_model_forward.7} parent=43 // pred_region
        _
      $region48: #{local_model_forward.7} parent=43 // pred_fallthru
        _
    $region44: #{local_model_forward.7} parent=5 // pred_fallthru
      _
    %p1019 = scmp.le.s32.totalorder 2, %s12
    // Predicated region
    $region49: #{local_model_forward.7} parent=5 // pred_check
      %p1020 = pneg %p1019
    $region50: #{local_model_forward.7} parent=5 // pred_check_branch
      %1022 = sbr.rel (%p1020) target = $region52
    $region51: #{local_model_forward.7} parent=5 // pred_region
      %s1023 = ssub.s32 %s12, 2
      // Predicated region
      $region53: #{local_model_forward.7} parent=51 // pred_check
        %p1024 = pneg %p187
      $region54: #{local_model_forward.7} parent=51 // pred_check_branch
        %1026 = sbr.rel (%p1024) target = $region56
      $region55: #{local_model_forward.7} parent=51 // pred_region
        %p1027 = scmp.lt.s32.totalorder %s18, 1
        %s1028 = scalar_select %p1027, %s18, 1
        %s1029 = smul.addr %s1028, 2
        %s1030 = smul.addr %s1029, 8
        %s1031 = scalar_lea.vmem %s6, %s1030
      $region56: #{local_model_forward.7} parent=51 // pred_fallthru
        _
    $region52: #{local_model_forward.7} parent=5 // pred_fallthru
      _
  $region6: #{local_model_forward.7} parent=0 // loop_footer
    %s16 = sadd.s32 1, %s12
  $region7: #{local_model_forward.7} parent=0 // loop_footer_branch
    %11 = sbr.rel target = $region3
  $region8: #{local_model_forward.7} parent=0 // loop_exit
    _

</llo_original>
